<compile_context>
chip_gen: v6e
topology: v6e:2x2x1
jax: 0.10.0
libtpu: 0.0.40
codegen_flags: <defaults>
</compile_context>

<pallas_src>
import math

import jax
import jax.numpy as jnp
from jax import lax
from jax.experimental import pallas as pl
from jax.experimental.pallas import tpu as pltpu

EPS_BN = 1e-5
NEG_BIG = jnp.float32(-3.0e38)          # finite "minus infinity" for masked max
# Fuse an entire MLP into one kernel only if its bf16 weights are small enough
# to sit (double-buffered) in VMEM on every TPU generation (incl. v7x, 64 MiB).
FUSE_WEIGHT_BYTES_LIMIT = 6 * 1024 * 1024


def _round_up(x, m):
    return ((x + m - 1) // m) * m


def _row_tile(m, tm_max=256):
    """Row tile: 256 for big inputs, else the 8-rounded row count (single tile)."""
    if m >= tm_max:
        return tm_max
    return _round_up(m, 8)


def _pad_rows(x, tm):
    m = x.shape[0]
    m_pad = _round_up(m, tm)
    if m_pad != m:
        x = jnp.pad(x, ((0, m_pad - m), (0, 0)))
    return x, m


# ----------------------------------------------------------------------------
# Pallas kernels
# ----------------------------------------------------------------------------
def _make_fused_mlp_kernel(num_layers):
    """Whole MLP (Linear -> ReLU -> BN(eval), folded) on one row tile.

    refs = (x, [w, b, shift] * num_layers, out).  Weights are bf16 and resident
    (constant index maps); intermediates stay in VMEM/vregs."""
    def kernel(*refs):
        x_ref = refs[0]
        o_ref = refs[-1]
        h = x_ref[...]
        for l in range(num_layers):
            w_ref, b_ref, t_ref = refs[1 + 3 * l: 4 + 3 * l]
            z = jnp.dot(h.astype(jnp.bfloat16), w_ref[...],
                        preferred_element_type=jnp.float32)
            h = jnp.maximum(z + b_ref[...], 0.0) + t_ref[...]
        o_ref[...] = h
    return kernel


def _layer_kernel(x_ref, w_ref, b_ref, t_ref, o_ref):
    """Single fused Linear -> ReLU -> BN(eval, folded) on one (rows, cout) tile."""
    z = jnp.dot(x_ref[...].astype(jnp.bfloat16), w_ref[...],
                preferred_element_type=jnp.float32)
    o_ref[...] = jnp.maximum(z + b_ref[...], 0.0) + t_ref[...]


def _head_kernel(x_ref, w1_ref, b1_ref, w2_ref, b2_ref, o_ref):
    """conv1(1x1)+bn1(folded) -> relu -> dropout(eval: identity) -> conv2(1x1)
    -> log_softmax over the (padded, lane-dense) class axis."""
    h = jnp.dot(x_ref[...].astype(jnp.bfloat16), w1_ref[...],
                preferred_element_type=jnp.float32)
    h = jnp.maximum(h + b1_ref[...], 0.0)
    # drop1: Dropout(0.5) in eval mode is the identity.
    logits = jnp.dot(h.astype(jnp.bfloat16), w2_ref[...],
                     preferred_element_type=jnp.float32) + b2_ref[...]
    # Padded class lanes carry a -1e30 bias -> exp underflows to 0, max unaffected.
    mx = jnp.max(logits, axis=-1, keepdims=True)
    z = logits - mx
    lse = jnp.log(jnp.sum(jnp.exp(z), axis=-1, keepdims=True))
    o_ref[...] = z - lse


# ----------------------------------------------------------------------------
# Pallas wrappers
# ----------------------------------------------------------------------------
def fused_mlp(x, layers):
    """x: [M, Cin] f32; layers: list of (w_bf16[Ci,Co], b_f32[1,Co], shift_f32[1,Co])."""
    m, cin = x.shape
    cout = layers[-1][0].shape[1]
    tm = _row_tile(m)
    x_p, m_orig = _pad_rows(x, tm)
    m_pad = x_p.shape[0]

    args = [x_p]
    in_specs = [pl.BlockSpec((tm, cin), lambda i: (i, 0))]
    for (w, b, t) in layers:
        args += [w, b, t]
        in_specs += [
            pl.BlockSpec(w.shape, lambda i: (0, 0)),
            pl.BlockSpec(b.shape, lambda i: (0, 0)),
            pl.BlockSpec(t.shape, lambda i: (0, 0)),
        ]

    out = pl.pallas_call(
        _make_fused_mlp_kernel(len(layers)),
        out_shape=jax.ShapeDtypeStruct((m_pad, cout), jnp.float32),
        grid_spec=pltpu.PrefetchScalarGridSpec(
            num_scalar_prefetch=0,
            grid=(m_pad // tm,),
            in_specs=in_specs,
            out_specs=pl.BlockSpec((tm, cout), lambda i: (i, 0)),
        ),
        compiler_params=pltpu.CompilerParams(
            dimension_semantics=("parallel",),
            vmem_limit_bytes=40 * 1024 * 1024,
        ),
    )(*args)
    return out[:m_orig]


def linear_relu_bn(x, w, b, t):
    """Per-layer path (used when the whole MLP's weights are too big to keep
    resident).  x: [M, Cin]; w: bf16 [Cin, Cout]; b/t: f32 [1, Cout]."""
    m, cin = x.shape
    cout = w.shape[1]
    tm = _row_tile(m)
    x_p, m_orig = _pad_rows(x, tm)
    m_pad = x_p.shape[0]

    if cout % 256 == 0:
        tn = 256
    elif cout % 128 == 0:
        tn = 128
    else:
        tn = cout

    out = pl.pallas_call(
        _layer_kernel,
        out_shape=jax.ShapeDtypeStruct((m_pad, cout), jnp.float32),
        grid_spec=pltpu.PrefetchScalarGridSpec(
            num_scalar_prefetch=0,
            grid=(m_pad // tm, cout // tn),
            in_specs=[
                pl.BlockSpec((tm, cin), lambda i, j: (i, 0)),
                pl.BlockSpec((cin, tn), lambda i, j: (0, j)),
                pl.BlockSpec((1, tn), lambda i, j: (0, j)),
                pl.BlockSpec((1, tn), lambda i, j: (0, j)),
            ],
            out_specs=pl.BlockSpec((tm, tn), lambda i, j: (i, j)),
        ),
        compiler_params=pltpu.CompilerParams(
            dimension_semantics=("parallel", "parallel"),
            vmem_limit_bytes=32 * 1024 * 1024,
        ),
    )(x_p, w, b, t)
    return out[:m_orig]


def apply_mlp(layers, x):
    weight_bytes = sum(int(w.size) * w.dtype.itemsize for (w, _, _) in layers)
    if weight_bytes <= FUSE_WEIGHT_BYTES_LIMIT:
        return fused_mlp(x, layers)
    for (w, b, t) in layers:
        x = linear_relu_bn(x, w, b, t)
    return x


def head_forward(x, w1, b1, w2p, b2p, num_classes):
    """x: [N, 1024]; w1 bf16 [1024,1024] (bn1 folded); w2p bf16 [1024, Cpad];
    b2p f32 [1, Cpad] with -1e30 on padded lanes.  Returns [N, num_classes]."""
    n, cin = x.shape
    c_pad = w2p.shape[1]
    tm = _row_tile(n)
    x_p, n_orig = _pad_rows(x, tm)
    n_pad = x_p.shape[0]

    out = pl.pallas_call(
        _head_kernel,
        out_shape=jax.ShapeDtypeStruct((n_pad, c_pad), jnp.float32),
        grid_spec=pltpu.PrefetchScalarGridSpec(
            num_scalar_prefetch=0,
            grid=(n_pad // tm,),
            in_specs=[
                pl.BlockSpec((tm, cin), lambda i: (i, 0)),
                pl.BlockSpec(w1.shape, lambda i: (0, 0)),
                pl.BlockSpec(b1.shape, lambda i: (0, 0)),
                pl.BlockSpec(w2p.shape, lambda i: (0, 0)),
                pl.BlockSpec(b2p.shape, lambda i: (0, 0)),
            ],
            out_specs=pl.BlockSpec((tm, c_pad), lambda i: (i, 0)),
        ),
        compiler_params=pltpu.CompilerParams(
            dimension_semantics=("parallel",),
            vmem_limit_bytes=32 * 1024 * 1024,
        ),
    )(x_p, w1, b1, w2p, b2p)
    return out[:n_orig, :num_classes]


# ----------------------------------------------------------------------------
# Parameter init (deterministic, synthetic).  BatchNorm is folded at init:
#   Lin -> ReLU -> BN  becomes  relu(x @ (W*s) + b*s) + (beta - mean*s)
#   (valid because gamma > 0, so relu(z)*s == relu(z*s)).
# ----------------------------------------------------------------------------
def init_mlp_params(key, channels):
    layers = []
    for i in range(1, len(channels)):
        cin, cout = channels[i - 1], channels[i]
        key, kw, kb = jax.random.split(key, 3)
        w = jax.random.normal(kw, (cin, cout), jnp.float32) * jnp.sqrt(2.0 / cin)
        b = jax.random.normal(kb, (1, cout), jnp.float32) * 0.01
        # BatchNorm1d defaults: gamma=1, beta=0, running_mean=0, running_var=1.
        gamma = jnp.ones((cout,), jnp.float32)
        beta = jnp.zeros((cout,), jnp.float32)
        mean = jnp.zeros((cout,), jnp.float32)
        var = jnp.ones((cout,), jnp.float32)
        scale = gamma / jnp.sqrt(var + EPS_BN)          # > 0
        w_f = (w * scale[None, :]).astype(jnp.bfloat16)
        b_f = (b * scale[None, :]).astype(jnp.float32)
        shift = (beta - mean * scale)[None, :].astype(jnp.float32)
        layers.append((w_f, b_f, shift))
    return key, layers


def init_net_params(key, num_classes):
    params = {}
    key, params["sa1"] = init_mlp_params(key, [3, 128, 256, 512])
    key, params["sa2"] = init_mlp_params(key, [512 + 3, 512, 1024, 1024])
    key, params["sa3"] = init_mlp_params(key, [1024 + 3, 1024, 2048, 2048])
    key, params["fp3"] = init_mlp_params(key, [3072, 1024, 1024])
    key, params["fp2"] = init_mlp_params(key, [1536, 1024, 1024])
    key, params["fp1"] = init_mlp_params(key, [1024, 1024, 1024])

    key, k1, k2, k3, k4 = jax.random.split(key, 5)
    w1 = jax.random.normal(k1, (1024, 1024), jnp.float32) * jnp.sqrt(2.0 / 1024)
    b1 = jax.random.normal(k2, (1, 1024), jnp.float32) * 0.01
    # bn1 (before relu):  bn(conv(x)) = x @ (W*s) + ((b - mean)*s + beta)
    gamma = jnp.ones((1024,), jnp.float32)
    beta = jnp.zeros((1024,), jnp.float32)
    mean = jnp.zeros((1024,), jnp.float32)
    var = jnp.ones((1024,), jnp.float32)
    s1 = gamma / jnp.sqrt(var + EPS_BN)
    params["head_w1"] = (w1 * s1[None, :]).astype(jnp.bfloat16)
    params["head_b1"] = ((b1 - mean[None, :]) * s1[None, :] + beta[None, :]).astype(jnp.float32)

    w2 = jax.random.normal(k3, (1024, num_classes), jnp.float32) * jnp.sqrt(2.0 / 1024)
    b2 = jax.random.normal(k4, (1, num_classes), jnp.float32) * 0.01
    # Pad the class axis to 128 lanes (lane-dense stores / softmax); padded
    # columns get zero weights and a -1e30 bias so they vanish in log_softmax.
    c_pad = _round_up(num_classes, 128)
    w2p = jnp.zeros((1024, c_pad), jnp.float32).at[:, :num_classes].set(w2)
    b2p = jnp.full((1, c_pad), -1e30, jnp.float32).at[:, :num_classes].set(b2)
    params["head_w2"] = w2p.astype(jnp.bfloat16)
    params["head_b2"] = b2p
    return params


# ----------------------------------------------------------------------------
# Graph glue (plain JAX, dense/masked with static shapes)
# ----------------------------------------------------------------------------
# TODO(synk): the [M, N, C+3] per-pair feature tensor in sa_module is still
#             materialized in HBM; fusing pos_j - pos_i construction into the
#             first MLP kernel (scalar-prefetched neighbor indices) is the next
#             structural win for real FSCT-scale clouds.
def fps_cloud(p, num_samples):
    """Farthest point sampling within one cloud; deterministic start at point 0."""
    # TODO(synk): torch_cluster.fps uses a random start point by default.
    n = p.shape[0]

    def body(i, state):
        sel, mind = state
        last = sel[i - 1]
        d = jnp.sum((p - p[last]) ** 2, axis=-1)
        mind = jnp.minimum(mind, d)
        sel = sel.at[i].set(jnp.argmax(mind).astype(jnp.int32))
        return sel, mind

    sel0 = jnp.zeros((num_samples,), jnp.int32)
    mind0 = jnp.full((n,), jnp.inf, jnp.float32)
    sel, _ = lax.fori_loop(1, num_samples, body, (sel0, mind0))
    return sel


def fps_batched(pos, ratio, num_clouds, pts_per_cloud):
    m = math.ceil(ratio * pts_per_cloud)
    idxs = []
    for b in range(num_clouds):
        start = b * pts_per_cloud
        p = pos[start:start + pts_per_cloud]
        idxs.append(fps_cloud(p, m) + start)
    return jnp.concatenate(idxs, axis=0)


def sa_module(x, pos, batch, ratio, r, layers, num_clouds, pts_per_cloud,
              max_num_neighbors=64):
    """SAModule: fps -> radius graph -> PointNetConv(NN, aggr='max')."""
    # TODO(synk): PyG PointNetConv's add_self_loops quirk on bipartite graphs is
    #             not replicated (the center is already its own radius neighbor).
    idx = fps_batched(pos, ratio, num_clouds, pts_per_cloud)
    pos_c = pos[idx]
    batch_c = batch[idx]
    m, n = pos_c.shape[0], pos.shape[0]

    rel = pos[None, :, :] - pos_c[:, None, :]          # [M, N, 3]  (pos_j - pos_i)
    d2 = jnp.sum(rel * rel, axis=-1)                   # [M, N]
    same = batch_c[:, None] == batch[None, :]
    within = (d2 <= r * r) & same
    # torch_cluster.radius keeps at most max_num_neighbors per query (in order).
    rank = jnp.cumsum(within.astype(jnp.int32), axis=1)
    within = within & (rank <= max_num_neighbors)

    if x is None:
        feats = rel
    else:
        feats = jnp.concatenate(
            [jnp.broadcast_to(x[None, :, :], (m, n, x.shape[1])), rel], axis=-1)
    h = apply_mlp(layers, feats.reshape(m * n, feats.shape[-1]))
    h = h.reshape(m, n, -1)
    h = jnp.where(within[:, :, None], h, NEG_BIG)      # finite fill keeps max safe
    out = jnp.max(h, axis=1)                           # max aggregation
    return out, pos_c, batch_c


def global_sa_module(x, pos, batch, layers, num_clouds):
    h = apply_mlp(layers, jnp.concatenate([x, pos], axis=1))
    out = jax.ops.segment_max(h, batch, num_segments=num_clouds)
    pos_out = jnp.zeros((num_clouds, 3), jnp.float32)
    batch_out = jnp.arange(num_clouds, dtype=jnp.int32)
    return out, pos_out, batch_out


def knn_interpolate(x, pos_x, pos_y, batch_x, batch_y, k):
    d2 = jnp.sum((pos_y[:, None, :] - pos_x[None, :, :]) ** 2, axis=-1)
    same = batch_y[:, None] == batch_x[None, :]
    d2 = jnp.where(same, d2, jnp.inf)
    kk = min(k, pos_x.shape[0])
    neg_d2, nbr = lax.top_k(-d2, kk)                   # kk smallest distances
    nn_d2 = -neg_d2
    valid = jnp.isfinite(nn_d2)
    w = jnp.where(valid, 1.0 / jnp.maximum(nn_d2, 1e-16), 0.0)
    xk = x[nbr]                                        # [Ny, kk, F]
    num = jnp.sum(xk * w[:, :, None], axis=1)
    den = jnp.sum(w, axis=1, keepdims=True)
    return num / den


def fp_module(k, layers, x, pos, batch, x_skip, pos_skip, batch_skip):
    xi = knn_interpolate(x, pos, pos_skip, batch, batch_skip, k)
    if x_skip is not None:
        xi = jnp.concatenate([xi, x_skip], axis=1)
    return apply_mlp(layers, xi), pos_skip, batch_skip


# ----------------------------------------------------------------------------
# Full Net forward
# ----------------------------------------------------------------------------
def net_forward(params, pos, batch, num_clouds, pts_per_cloud, num_classes):
    sa0 = (None, pos, batch)                     # data.x is None for this net
    sa1 = sa_module(None, pos, batch, 0.1, 0.2, params["sa1"],
                    num_clouds, pts_per_cloud)
    n1 = math.ceil(0.1 * pts_per_cloud)
    sa2 = sa_module(sa1[0], sa1[1], sa1[2], 0.05, 0.4, params["sa2"],
                    num_clouds, n1)
    sa3 = global_sa_module(sa2[0], sa2[1], sa2[2], params["sa3"], num_clouds)

    fp3 = fp_module(1, params["fp3"], *sa3, *sa2)
    fp2 = fp_module(3, params["fp2"], *fp3, *sa1)
    x, _, _ = fp_module(3, params["fp1"], *fp2, *sa0)

    # x: [N, 1024] == PyTorch's [1, 1024, N] after unsqueeze+permute, transposed.
    logp = head_forward(x, params["head_w1"], params["head_b1"],
                        params["head_w2"], params["head_b2"],
                        num_classes)             # [N, num_classes]
    return jnp.transpose(logp)[None, :, :]       # PyTorch output layout [1, C, N]


if __name__ == "__main__":
    num_classes = 4
    num_clouds = 2
    pts_per_cloud = 32
    n = num_clouds * pts_per_cloud

    key = jax.random.PRNGKey(0)
    kpos, kparam = jax.random.split(key)
    pos = jax.random.uniform(kpos, (n, 3), jnp.float32)
    batch = jnp.repeat(jnp.arange(num_clouds, dtype=jnp.int32), pts_per_cloud)

    params = init_net_params(kparam, num_classes)
    out = net_forward(params, pos, batch, num_clouds, pts_per_cloud, num_classes)
    out = jax.block_until_ready(out)

    assert out.shape == (1, num_classes, n), out.shape
    assert bool(jnp.all(jnp.isfinite(out)))
    # log_softmax sanity: probabilities sum to 1 along the class axis
    assert bool(jnp.allclose(jnp.sum(jnp.exp(out), axis=1), 1.0, atol=1e-4))
    print("KERNEL_OK")
</pallas_src>

<mosaic_0001>
module attributes {stable_mosaic.version = 11 : i64} {
  func.func @kernel(%arg0: i32, %arg1: memref<256x3xf32, #tpu.memory_space<vmem>>, %arg2: memref<3x128xbf16, #tpu.memory_space<vmem>>, %arg3: memref<1x128xf32, #tpu.memory_space<vmem>>, %arg4: memref<1x128xf32, #tpu.memory_space<vmem>>, %arg5: memref<128x256xbf16, #tpu.memory_space<vmem>>, %arg6: memref<1x256xf32, #tpu.memory_space<vmem>>, %arg7: memref<1x256xf32, #tpu.memory_space<vmem>>, %arg8: memref<256x512xbf16, #tpu.memory_space<vmem>>, %arg9: memref<1x512xf32, #tpu.memory_space<vmem>>, %arg10: memref<1x512xf32, #tpu.memory_space<vmem>>, %arg11: memref<256x512xf32, #tpu.memory_space<vmem>>) attributes {dimension_semantics = [#tpu.dimension_semantics<parallel>], iteration_bounds = array<i64: 2>, scalar_prefetch = 0 : i64, scratch_operands = 0 : i64, tpu.core_type = #tpu.core_type<tc>, window_params = [{transform_indices = @transform_0, window_bounds = array<i64: 256, 3>}, {pipeline_mode = #tpu.pipeline_mode<synchronous>, transform_indices = @transform_1, window_bounds = array<i64: 3, 128>}, {pipeline_mode = #tpu.pipeline_mode<synchronous>, transform_indices = @transform_2, window_bounds = array<i64: 1, 128>}, {pipeline_mode = #tpu.pipeline_mode<synchronous>, transform_indices = @transform_3, window_bounds = array<i64: 1, 128>}, {pipeline_mode = #tpu.pipeline_mode<synchronous>, transform_indices = @transform_4, window_bounds = array<i64: 128, 256>}, {pipeline_mode = #tpu.pipeline_mode<synchronous>, transform_indices = @transform_5, window_bounds = array<i64: 1, 256>}, {pipeline_mode = #tpu.pipeline_mode<synchronous>, transform_indices = @transform_6, window_bounds = array<i64: 1, 256>}, {pipeline_mode = #tpu.pipeline_mode<synchronous>, transform_indices = @transform_7, window_bounds = array<i64: 256, 512>}, {pipeline_mode = #tpu.pipeline_mode<synchronous>, transform_indices = @transform_8, window_bounds = array<i64: 1, 512>}, {pipeline_mode = #tpu.pipeline_mode<synchronous>, transform_indices = @transform_9, window_bounds = array<i64: 1, 512>}, {transform_indices = @transform_10, window_bounds = array<i64: 256, 512>}]} {
    %c0 = arith.constant 0 : index
    %c0_0 = arith.constant 0 : index
    %0 = vector.load %arg1[%c0, %c0_0] : memref<256x3xf32, #tpu.memory_space<vmem>>, vector<256x3xf32>
    %1 = arith.truncf %0 : vector<256x3xf32> to vector<256x3xbf16>
    %c0_1 = arith.constant 0 : index
    %c0_2 = arith.constant 0 : index
    %2 = vector.load %arg2[%c0_1, %c0_2] : memref<3x128xbf16, #tpu.memory_space<vmem>>, vector<3x128xbf16>
    %cst = arith.constant dense<0.000000e+00> : vector<256x128xf32>
    %3 = tpu.matmul %1, %2, %cst {dimension_numbers = #tpu.dot_dimension_numbers<[1], [0], [0], [1], [0, 0, 1, 1], [], []>} : vector<256x3xbf16>, vector<3x128xbf16>, vector<256x128xf32> -> vector<256x128xf32>
    %c0_3 = arith.constant 0 : index
    %c0_4 = arith.constant 0 : index
    %4 = vector.load %arg3[%c0_3, %c0_4] : memref<1x128xf32, #tpu.memory_space<vmem>>, vector<1x128xf32>
    %5 = vector.broadcast %4 : vector<1x128xf32> to vector<256x128xf32>
    %6 = arith.addf %3, %5 : vector<256x128xf32>
    %cst_5 = arith.constant 0.000000e+00 : f32
    %7 = vector.broadcast %cst_5 : f32 to vector<256x128xf32>
    %8 = arith.maximumf %6, %7 : vector<256x128xf32>
    %c0_6 = arith.constant 0 : index
    %c0_7 = arith.constant 0 : index
    %9 = vector.load %arg4[%c0_6, %c0_7] : memref<1x128xf32, #tpu.memory_space<vmem>>, vector<1x128xf32>
    %10 = vector.broadcast %9 : vector<1x128xf32> to vector<256x128xf32>
    %11 = arith.addf %8, %10 : vector<256x128xf32>
    %12 = arith.truncf %11 : vector<256x128xf32> to vector<256x128xbf16>
    %c0_8 = arith.constant 0 : index
    %c0_9 = arith.constant 0 : index
    %13 = vector.load %arg5[%c0_8, %c0_9] : memref<128x256xbf16, #tpu.memory_space<vmem>>, vector<128x256xbf16>
    %cst_10 = arith.constant dense<0.000000e+00> : vector<256x256xf32>
    %14 = tpu.matmul %12, %13, %cst_10 {dimension_numbers = #tpu.dot_dimension_numbers<[1], [0], [0], [1], [0, 0, 1, 1], [], []>} : vector<256x128xbf16>, vector<128x256xbf16>, vector<256x256xf32> -> vector<256x256xf32>
    %c0_11 = arith.constant 0 : index
    %c0_12 = arith.constant 0 : index
    %15 = vector.load %arg6[%c0_11, %c0_12] : memref<1x256xf32, #tpu.memory_space<vmem>>, vector<1x256xf32>
    %16 = vector.broadcast %15 : vector<1x256xf32> to vector<256x256xf32>
    %17 = arith.addf %14, %16 : vector<256x256xf32>
    %cst_13 = arith.constant 0.000000e+00 : f32
    %18 = vector.broadcast %cst_13 : f32 to vector<256x256xf32>
    %19 = arith.maximumf %17, %18 : vector<256x256xf32>
    %c0_14 = arith.constant 0 : index
    %c0_15 = arith.constant 0 : index
    %20 = vector.load %arg7[%c0_14, %c0_15] : memref<1x256xf32, #tpu.memory_space<vmem>>, vector<1x256xf32>
    %21 = vector.broadcast %20 : vector<1x256xf32> to vector<256x256xf32>
    %22 = arith.addf %19, %21 : vector<256x256xf32>
    %23 = arith.truncf %22 : vector<256x256xf32> to vector<256x256xbf16>
    %c0_16 = arith.constant 0 : index
    %c0_17 = arith.constant 0 : index
    %24 = vector.load %arg8[%c0_16, %c0_17] : memref<256x512xbf16, #tpu.memory_space<vmem>>, vector<256x512xbf16>
    %cst_18 = arith.constant dense<0.000000e+00> : vector<256x512xf32>
    %25 = tpu.matmul %23, %24, %cst_18 {dimension_numbers = #tpu.dot_dimension_numbers<[1], [0], [0], [1], [0, 0, 1, 1], [], []>} : vector<256x256xbf16>, vector<256x512xbf16>, vector<256x512xf32> -> vector<256x512xf32>
    %c0_19 = arith.constant 0 : index
    %c0_20 = arith.constant 0 : index
    %26 = vector.load %arg9[%c0_19, %c0_20] : memref<1x512xf32, #tpu.memory_space<vmem>>, vector<1x512xf32>
    %27 = vector.broadcast %26 : vector<1x512xf32> to vector<256x512xf32>
    %28 = arith.addf %25, %27 : vector<256x512xf32>
    %cst_21 = arith.constant 0.000000e+00 : f32
    %29 = vector.broadcast %cst_21 : f32 to vector<256x512xf32>
    %30 = arith.maximumf %28, %29 : vector<256x512xf32>
    %c0_22 = arith.constant 0 : index
    %c0_23 = arith.constant 0 : index
    %31 = vector.load %arg10[%c0_22, %c0_23] : memref<1x512xf32, #tpu.memory_space<vmem>>, vector<1x512xf32>
    %32 = vector.broadcast %31 : vector<1x512xf32> to vector<256x512xf32>
    %33 = arith.addf %30, %32 : vector<256x512xf32>
    %c0_24 = arith.constant 0 : index
    %c0_25 = arith.constant 0 : index
    %34 = vector.load %arg11[%c0_24, %c0_25] : memref<256x512xf32, #tpu.memory_space<vmem>>, vector<256x512xf32>
    tpu.vector_store %arg11[%c0_24, %c0_25], %33 {strides = array<i32>} : memref<256x512xf32, #tpu.memory_space<vmem>>, vector<256x512xf32>,
    return
  }
  func.func @transform_0(%arg0: i32) -> (i32, i32) {
    %c0_i32 = arith.constant 0 : i32
    %c0_i32_0 = arith.constant 0 : i32
    return %arg0, %c0_i32 : i32, i32
  }
  func.func @transform_1(%arg0: i32) -> (i32, i32) {
    %c0_i32 = arith.constant 0 : i32
    %c0_i32_0 = arith.constant 0 : i32
    %c0_i32_1 = arith.constant 0 : i32
    return %c0_i32, %c0_i32_0 : i32, i32
  }
  func.func @transform_2(%arg0: i32) -> (i32, i32) {
    %c0_i32 = arith.constant 0 : i32
    %c0_i32_0 = arith.constant 0 : i32
    %c0_i32_1 = arith.constant 0 : i32
    return %c0_i32, %c0_i32_0 : i32, i32
  }
  func.func @transform_3(%arg0: i32) -> (i32, i32) {
    %c0_i32 = arith.constant 0 : i32
    %c0_i32_0 = arith.constant 0 : i32
    %c0_i32_1 = arith.constant 0 : i32
    return %c0_i32, %c0_i32_0 : i32, i32
  }
  func.func @transform_4(%arg0: i32) -> (i32, i32) {
    %c0_i32 = arith.constant 0 : i32
    %c0_i32_0 = arith.constant 0 : i32
    %c0_i32_1 = arith.constant 0 : i32
    return %c0_i32, %c0_i32_0 : i32, i32
  }
  func.func @transform_5(%arg0: i32) -> (i32, i32) {
    %c0_i32 = arith.constant 0 : i32
    %c0_i32_0 = arith.constant 0 : i32
    %c0_i32_1 = arith.constant 0 : i32
    return %c0_i32, %c0_i32_0 : i32, i32
  }
  func.func @transform_6(%arg0: i32) -> (i32, i32) {
    %c0_i32 = arith.constant 0 : i32
    %c0_i32_0 = arith.constant 0 : i32
    %c0_i32_1 = arith.constant 0 : i32
    return %c0_i32, %c0_i32_0 : i32, i32
  }
  func.func @transform_7(%arg0: i32) -> (i32, i32) {
    %c0_i32 = arith.constant 0 : i32
    %c0_i32_0 = arith.constant 0 : i32
    %c0_i32_1 = arith.constant 0 : i32
    return %c0_i32, %c0_i32_0 : i32, i32
  }
  func.func @transform_8(%arg0: i32) -> (i32, i32) {
    %c0_i32 = arith.constant 0 : i32
    %c0_i32_0 = arith.constant 0 : i32
    %c0_i32_1 = arith.constant 0 : i32
    return %c0_i32, %c0_i32_0 : i32, i32
  }
  func.func @transform_9(%arg0: i32) -> (i32, i32) {
    %c0_i32 = arith.constant 0 : i32
    %c0_i32_0 = arith.constant 0 : i32
    %c0_i32_1 = arith.constant 0 : i32
    return %c0_i32, %c0_i32_0 : i32, i32
  }
  func.func @transform_10(%arg0: i32) -> (i32, i32) {
    %c0_i32 = arith.constant 0 : i32
    %c0_i32_0 = arith.constant 0 : i32
    return %arg0, %c0_i32 : i32, i32
  }
}

</mosaic_0001>

<llo_original>
// kernel: tpu_custom_call.1
$region0: #{tpu_custom_call.1}
  #allocation0 [shape = 'u32[]', space=smem, size = 0x4, offset = 0x4, fixed_abs, tag = 'smem constant byte address 0x4 - core index']
  #allocation1 [shape = 'u32[144,128]{1,0:T(1,128)}', space=vmem, size = 0x12000, scoped, tag = 'internal scratch']
  %s0 = inlined_call_operand.vmem [shape: f32[512,3], index: 0, kind: input, shape index: {}]
  %s1 = inlined_call_operand.vmem [shape: bf16[3,128], index: 1, kind: input, shape index: {}]
  %s2 = inlined_call_operand.vmem [shape: f32[1,128], index: 2, kind: input, shape index: {}]
  %s3 = inlined_call_operand.vmem [shape: f32[1,128], index: 3, kind: input, shape index: {}]
  %s4 = inlined_call_operand.hbm [shape: bf16[128,256], index: 4, kind: input, shape index: {}]
  %s5 = inlined_call_operand.vmem [shape: f32[1,256], index: 5, kind: input, shape index: {}]
  %s6 = inlined_call_operand.vmem [shape: f32[1,256], index: 6, kind: input, shape index: {}]
  %s7 = inlined_call_operand.vmem [shape: bf16[256,512], index: 7, kind: input, shape index: {}]
  %s8 = inlined_call_operand.vmem [shape: f32[1,512], index: 8, kind: input, shape index: {}]
  %s9 = inlined_call_operand.vmem [shape: f32[1,512], index: 9, kind: input, shape index: {}]
  %s10 = inlined_call_operand.hbm [shape: f32[512,512], index: 10, kind: output, shape index: {}]
  %s11 = sld [smem:[#allocation0]]
  $region77: #{tpu_custom_call.1} parent=0
    _
  %s13 = ssub.s32 1, %s11
  %s14 = scalar_select 0, %s13, %s11
  $region1: #{tpu_custom_call.1} parent=0
    #allocation2 [shape = 'u8[65536]{0}', space=vmem, size = 0x10000, scoped, tag = 'input window, operand 4, single buffered']
    #allocation3 [shape = 's32[2]{0}', space=sflag, size = 0x8, scoped, tag = 'scoped memory for tpu_custom_call.1']
    #allocation4 [shape = 's32[2]{0}', space=sflag, size = 0x8, scoped, tag = 'scoped memory for tpu_custom_call.1']
    #allocation5 [shape = 'u8[1048576]{0}', space=vmem, size = 0x100000, scoped, tag = 'output window, operand 0']
    %15 = vsyncpa [#allocation3], 0
    %16 = vsyncpa [#allocation4], 0
    %s17 = scalar_lea.sflag [#allocation4], 1
    %18 = vsyncpa %s17, 0
    loop: start=0, step=1, limit=4
    $region2: #{tpu_custom_call.1} parent=1 // loop_pre_header
      _
    $region3: #{tpu_custom_call.1} parent=1 // loop_header
      %s20 = sphi 0, %s24
      %p21 = scmp.ge.s32.totalorder %s20, 4
      %s30 = sphi 0, %s32
      %s33 = sphi 0, %s30
      %s34 = sphi 0, %s33
      %s50 = sphi 0, %s34
      %s54 = sphi 0, %s54
      %s56 = sphi 0, %s54
      %s57 = sphi 0, %s56
      %s71 = sphi 0, %s57
      %s75 = sphi 0, %s75
      %s77 = sphi 0, %s75
      %s78 = sphi 0, %s77
      %s92 = sphi 0, %s78
      %s96 = sphi 0, %s96
      %s98 = sphi 0, %s96
      %s99 = sphi 0, %s98
      %s113 = sphi 0, %s99
      %s117 = sphi 0, %s117
      %s119 = sphi 0, %s117
      %s120 = sphi 0, %s119
      %s134 = sphi 0, %s120
      %s138 = sphi 0, %s138
      %s140 = sphi 0, %s138
      %s141 = sphi 0, %s140
      %s155 = sphi 0, %s141
      %s159 = sphi 0, %s159
      %s161 = sphi 0, %s159
      %s162 = sphi 0, %s161
      %s176 = sphi 0, %s162
      %s180 = sphi 0, %s180
      %s182 = sphi 0, %s180
      %s183 = sphi 0, %s182
      %s197 = sphi 0, %s183
      %s201 = sphi 0, %s201
      %s203 = sphi 0, %s201
      %s204 = sphi 0, %s203
      %s218 = sphi 0, %s204
      %s222 = sphi 0, %s222
      %s224 = sphi 0, %s222
      %s225 = sphi 0, %s224
      %s239 = sphi 0, %s225
      %s245 = sphi 0, %s247
      %s248 = sphi 0, %s245
      %s249 = sphi 0, %s248
      %s265 = sphi 0, %s249
    $region4: #{tpu_custom_call.1} parent=1 // loop_header_branch
      %23 = sbr.rel (%p21) target = $region8
    $region5: #{tpu_custom_call.1} parent=1 // loop_body
      %s25 = ssub.s32 %s20, 1
      %s26 = ssub.s32 %s20, 2
      %s27 = sadd.s32 %s20, 1
      %s28 = ssub.s32 %s20, %s27
      %p29 = scmp.eq.s32.totalorder %s28, 0
      %s31 = sadd.s32 %s30, 1
      %s32 = scalar_select %p29, %s30, %s31
      %p35 = pneg %p29
      %p36 = scmp.eq.s32.totalorder %s20, 1
      %p37 = por %p35, %p36
      %p38 = scmp.ne.s32.totalorder %s30, %s33
      %p39 = scmp.eq.s32.totalorder %s20, 0
      %p40 = por %p38, %p39
      %p41 = scmp.ne.s32.totalorder %s30, %s33
      %p42 = scmp.eq.s32.totalorder %s25, 1
      %p43 = por %p41, %p42
      %p44 = scmp.ne.s32.totalorder %s33, %s34
      %p45 = scmp.eq.s32.totalorder %s25, 0
      %p46 = por %p44, %p45
      %p47 = scmp.ne.s32.totalorder %s33, %s34
      %p48 = scmp.eq.s32.totalorder %s26, 1
      %p49 = por %p47, %p48
      %p51 = scmp.ne.s32.totalorder %s34, %s50
      %p52 = scmp.eq.s32.totalorder %s26, 0
      %p53 = por %p51, %p52
      %s55 = sadd.s32 %s54, 1
      %p58 = scmp.eq.s32.totalorder %s20, 1
      %p59 = scmp.ne.s32.totalorder %s54, %s56
      %p60 = scmp.eq.s32.totalorder %s20, 0
      %p61 = por %p59, %p60
      %p62 = scmp.ne.s32.totalorder %s54, %s56
      %p63 = scmp.eq.s32.totalorder %s25, 1
      %p64 = por %p62, %p63
      %p65 = scmp.ne.s32.totalorder %s56, %s57
      %p66 = scmp.eq.s32.totalorder %s25, 0
      %p67 = por %p65, %p66
      %p68 = scmp.ne.s32.totalorder %s56, %s57
      %p69 = scmp.eq.s32.totalorder %s26, 1
      %p70 = por %p68, %p69
      %p72 = scmp.ne.s32.totalorder %s57, %s71
      %p73 = scmp.eq.s32.totalorder %s26, 0
      %p74 = por %p72, %p73
      %s76 = sadd.s32 %s75, 1
      %p79 = scmp.eq.s32.totalorder %s20, 1
      %p80 = scmp.ne.s32.totalorder %s75, %s77
      %p81 = scmp.eq.s32.totalorder %s20, 0
      %p82 = por %p80, %p81
      %p83 = scmp.ne.s32.totalorder %s75, %s77
      %p84 = scmp.eq.s32.totalorder %s25, 1
      %p85 = por %p83, %p84
      %p86 = scmp.ne.s32.totalorder %s77, %s78
      %p87 = scmp.eq.s32.totalorder %s25, 0
      %p88 = por %p86, %p87
      %p89 = scmp.ne.s32.totalorder %s77, %s78
      %p90 = scmp.eq.s32.totalorder %s26, 1
      %p91 = por %p89, %p90
      %p93 = scmp.ne.s32.totalorder %s78, %s92
      %p94 = scmp.eq.s32.totalorder %s26, 0
      %p95 = por %p93, %p94
      %s97 = sadd.s32 %s96, 1
      %p100 = scmp.eq.s32.totalorder %s20, 1
      %p101 = scmp.ne.s32.totalorder %s96, %s98
      %p102 = scmp.eq.s32.totalorder %s20, 0
      %p103 = por %p101, %p102
      %p104 = scmp.ne.s32.totalorder %s96, %s98
      %p105 = scmp.eq.s32.totalorder %s25, 1
      %p106 = por %p104, %p105
      %p107 = scmp.ne.s32.totalorder %s98, %s99
      %p108 = scmp.eq.s32.totalorder %s25, 0
      %p109 = por %p107, %p108
      %p110 = scmp.ne.s32.totalorder %s98, %s99
      %p111 = scmp.eq.s32.totalorder %s26, 1
      %p112 = por %p110, %p111
      %p114 = scmp.ne.s32.totalorder %s99, %s113
      %p115 = scmp.eq.s32.totalorder %s26, 0
      %p116 = por %p114, %p115
      %s118 = sadd.s32 %s117, 1
      %p121 = scmp.eq.s32.totalorder %s20, 1
      %p122 = scmp.ne.s32.totalorder %s117, %s119
      %p123 = scmp.eq.s32.totalorder %s20, 0
      %p124 = por %p122, %p123
      %p125 = scmp.ne.s32.totalorder %s117, %s119
      %p126 = scmp.eq.s32.totalorder %s25, 1
      %p127 = por %p125, %p126
      %p128 = scmp.ne.s32.totalorder %s119, %s120
      %p129 = scmp.eq.s32.totalorder %s25, 0
      %p130 = por %p128, %p129
      %p131 = scmp.ne.s32.totalorder %s119, %s120
      %p132 = scmp.eq.s32.totalorder %s26, 1
      %p133 = por %p131, %p132
      %p135 = scmp.ne.s32.totalorder %s120, %s134
      %p136 = scmp.eq.s32.totalorder %s26, 0
      %p137 = por %p135, %p136
      %s139 = sadd.s32 %s138, 1
      %p142 = scmp.eq.s32.totalorder %s20, 1
      %p143 = scmp.ne.s32.totalorder %s138, %s140
      %p144 = scmp.eq.s32.totalorder %s20, 0
      %p145 = por %p143, %p144
      %p146 = scmp.ne.s32.totalorder %s138, %s140
      %p147 = scmp.eq.s32.totalorder %s25, 1
      %p148 = por %p146, %p147
      %p149 = scmp.ne.s32.totalorder %s140, %s141
      %p150 = scmp.eq.s32.totalorder %s25, 0
      %p151 = por %p149, %p150
      %p152 = scmp.ne.s32.totalorder %s140, %s141
      %p153 = scmp.eq.s32.totalorder %s26, 1
      %p154 = por %p152, %p153
      %p156 = scmp.ne.s32.totalorder %s141, %s155
      %p157 = scmp.eq.s32.totalorder %s26, 0
      %p158 = por %p156, %p157
      %s160 = sadd.s32 %s159, 1
      %p163 = scmp.eq.s32.totalorder %s20, 1
      %p164 = scmp.ne.s32.totalorder %s159, %s161
      %p165 = scmp.eq.s32.totalorder %s20, 0
      %p166 = por %p164, %p165
      %p167 = scmp.ne.s32.totalorder %s159, %s161
      %p168 = scmp.eq.s32.totalorder %s25, 1
      %p169 = por %p167, %p168
      %p170 = scmp.ne.s32.totalorder %s161, %s162
      %p171 = scmp.eq.s32.totalorder %s25, 0
      %p172 = por %p170, %p171
      %p173 = scmp.ne.s32.totalorder %s161, %s162
      %p174 = scmp.eq.s32.totalorder %s26, 1
      %p175 = por %p173, %p174
      %p177 = scmp.ne.s32.totalorder %s162, %s176
      %p178 = scmp.eq.s32.totalorder %s26, 0
      %p179 = por %p177, %p178
      %s181 = sadd.s32 %s180, 1
      %p184 = scmp.eq.s32.totalorder %s20, 1
      %p185 = scmp.ne.s32.totalorder %s180, %s182
      %p186 = scmp.eq.s32.totalorder %s20, 0
      %p187 = por %p185, %p186
      %p188 = scmp.ne.s32.totalorder %s180, %s182
      %p189 = scmp.eq.s32.totalorder %s25, 1
      %p190 = por %p188, %p189
      %p191 = scmp.ne.s32.totalorder %s182, %s183
      %p192 = scmp.eq.s32.totalorder %s25, 0
      %p193 = por %p191, %p192
      %p194 = scmp.ne.s32.totalorder %s182, %s183
      %p195 = scmp.eq.s32.totalorder %s26, 1
      %p196 = por %p194, %p195
      %p198 = scmp.ne.s32.totalorder %s183, %s197
      %p199 = scmp.eq.s32.totalorder %s26, 0
      %p200 = por %p198, %p199
      %s202 = sadd.s32 %s201, 1
      %p205 = scmp.eq.s32.totalorder %s20, 1
      %p206 = scmp.ne.s32.totalorder %s201, %s203
      %p207 = scmp.eq.s32.totalorder %s20, 0
      %p208 = por %p206, %p207
      %p209 = scmp.ne.s32.totalorder %s201, %s203
      %p210 = scmp.eq.s32.totalorder %s25, 1
      %p211 = por %p209, %p210
      %p212 = scmp.ne.s32.totalorder %s203, %s204
      %p213 = scmp.eq.s32.totalorder %s25, 0
      %p214 = por %p212, %p213
      %p215 = scmp.ne.s32.totalorder %s203, %s204
      %p216 = scmp.eq.s32.totalorder %s26, 1
      %p217 = por %p215, %p216
      %p219 = scmp.ne.s32.totalorder %s204, %s218
      %p220 = scmp.eq.s32.totalorder %s26, 0
      %p221 = por %p219, %p220
      %s223 = sadd.s32 %s222, 1
      %p226 = scmp.eq.s32.totalorder %s20, 1
      %p227 = scmp.ne.s32.totalorder %s222, %s224
      %p228 = scmp.eq.s32.totalorder %s20, 0
      %p229 = por %p227, %p228
      %p230 = scmp.ne.s32.totalorder %s222, %s224
      %p231 = scmp.eq.s32.totalorder %s25, 1
      %p232 = por %p230, %p231
      %p233 = scmp.ne.s32.totalorder %s224, %s225
      %p234 = scmp.eq.s32.totalorder %s25, 0
      %p235 = por %p233, %p234
      %p236 = scmp.ne.s32.totalorder %s224, %s225
      %p237 = scmp.eq.s32.totalorder %s26, 1
      %p238 = por %p236, %p237
      %p240 = scmp.ne.s32.totalorder %s225, %s239
      %p241 = scmp.eq.s32.totalorder %s26, 0
      %p242 = por %p240, %p241
      %s243 = ssub.s32 %s20, %s27
      %p244 = scmp.eq.s32.totalorder %s243, 0
      %s246 = sadd.s32 %s245, 1
      %s247 = scalar_select %p244, %s245, %s246
      %p250 = pneg %p244
      %p251 = scmp.eq.s32.totalorder %s20, 1
      %p252 = por %p250, %p251
      %p253 = scmp.ne.s32.totalorder %s245, %s248
      %p254 = scmp.eq.s32.totalorder %s20, 0
      %p255 = por %p253, %p254
      %p256 = scmp.ne.s32.totalorder %s245, %s248
      %p257 = scmp.eq.s32.totalorder %s25, 1
      %p258 = por %p256, %p257
      %p259 = scmp.ne.s32.totalorder %s248, %s249
      %p260 = scmp.eq.s32.totalorder %s25, 0
      %p261 = por %p259, %p260
      %p262 = scmp.ne.s32.totalorder %s248, %s249
      %p263 = scmp.eq.s32.totalorder %s26, 1
      %p264 = por %p262, %p263
      %p266 = scmp.ne.s32.totalorder %s249, %s265
      %p267 = scmp.eq.s32.totalorder %s26, 0
      %p268 = por %p266, %p267
      %p269 = scmp.le.s32.totalorder 1, %s20
      %p270 = scmp.lt.s32.totalorder %s20, 3
      %p271 = pnand %p269, %p270
      %p272 = pneg %p271
      // Predicated region
      $region9: #{tpu_custom_call.1} parent=5 // pred_check
        _
      $region10: #{tpu_custom_call.1} parent=5 // pred_check_branch
        %274 = sbr.rel (%p271) target = $region12
      $region11: #{tpu_custom_call.1} parent=5 // pred_region
        %s275 = ssub.s32 %s20, 1
        // Predicated region
        $region13: #{tpu_custom_call.1} parent=11 // pred_check
          %p276 = pneg %p67
        $region14: #{tpu_custom_call.1} parent=11 // pred_check_branch
          %278 = sbr.rel (%p276) target = $region16
        $region15: #{tpu_custom_call.1} parent=11 // pred_region
          _
        $region16: #{tpu_custom_call.1} parent=11 // pred_fallthru
          _
        // Predicated region
        $region17: #{tpu_custom_call.1} parent=11 // pred_check
          %p279 = pneg %p88
        $region18: #{tpu_custom_call.1} parent=11 // pred_check_branch
          %281 = sbr.rel (%p279) target = $region20
        $region19: #{tpu_custom_call.1} parent=11 // pred_region
          _
        $region20: #{tpu_custom_call.1} parent=11 // pred_fallthru
          _
        // Predicated region
        $region21: #{tpu_custom_call.1} parent=11 // pred_check
          %p282 = pneg %p109
        $region22: #{tpu_custom_call.1} parent=11 // pred_check_branch
          %284 = sbr.rel (%p282) target = $region24
        $region23: #{tpu_custom_call.1} parent=11 // pred_region
          _
        $region24: #{tpu_custom_call.1} parent=11 // pred_fallthru
          _
        // Predicated region
        $region25: #{tpu_custom_call.1} parent=11 // pred_check
          %p285 = pneg %p130
        $region26: #{tpu_custom_call.1} parent=11 // pred_check_branch
          %287 = sbr.rel (%p285) target = $region28
        $region27: #{tpu_custom_call.1} parent=11 // pred_region
          %s289 = ssub.s32 2048, 2048
          %290 = vsyncadd [#allocation3], %s289
          %s291 = sshll.u32 [#allocation2], 4
          %s292 = int_to_ptr.vmem [resolvable:$true] %s291
          %297 = dma.hbm_to_vmem [thread:$0]  %s4, 2048, %s292, [#allocation3], 128, 128, 8
        $region28: #{tpu_custom_call.1} parent=11 // pred_fallthru
          _
        // Predicated region
        $region29: #{tpu_custom_call.1} parent=11 // pred_check
          %p298 = pneg %p151
        $region30: #{tpu_custom_call.1} parent=11 // pred_check_branch
          %300 = sbr.rel (%p298) target = $region32
        $region31: #{tpu_custom_call.1} parent=11 // pred_region
          _
        $region32: #{tpu_custom_call.1} parent=11 // pred_fallthru
          _
        // Predicated region
        $region33: #{tpu_custom_call.1} parent=11 // pred_check
          %p301 = pneg %p172
        $region34: #{tpu_custom_call.1} parent=11 // pred_check_branch
          %303 = sbr.rel (%p301) target = $region36
        $region35: #{tpu_custom_call.1} parent=11 // pred_region
          _
        $region36: #{tpu_custom_call.1} parent=11 // pred_fallthru
          _
        // Predicated region
        $region37: #{tpu_custom_call.1} parent=11 // pred_check
          %p304 = pneg %p193
        $region38: #{tpu_custom_call.1} parent=11 // pred_check_branch
          %306 = sbr.rel (%p304) target = $region40
        $region39: #{tpu_custom_call.1} parent=11 // pred_region
          _
        $region40: #{tpu_custom_call.1} parent=11 // pred_fallthru
          _
        // Predicated region
        $region41: #{tpu_custom_call.1} parent=11 // pred_check
          %p307 = pneg %p214
        $region42: #{tpu_custom_call.1} parent=11 // pred_check_branch
          %309 = sbr.rel (%p307) target = $region44
        $region43: #{tpu_custom_call.1} parent=11 // pred_region
          _
        $region44: #{tpu_custom_call.1} parent=11 // pred_fallthru
          _
        // Predicated region
        $region45: #{tpu_custom_call.1} parent=11 // pred_check
          %p310 = pneg %p235
        $region46: #{tpu_custom_call.1} parent=11 // pred_check_branch
          %312 = sbr.rel (%p310) target = $region48
        $region47: #{tpu_custom_call.1} parent=11 // pred_region
          _
        $region48: #{tpu_custom_call.1} parent=11 // pred_fallthru
          _
      $region12: #{tpu_custom_call.1} parent=5 // pred_fallthru
        _
      %p313 = scmp.lt.s32.totalorder %s20, 2
      // Predicated region
      $region49: #{tpu_custom_call.1} parent=5 // pred_check
        %p314 = pneg %p313
      $region50: #{tpu_custom_call.1} parent=5 // pred_check_branch
        %316 = sbr.rel (%p314) target = $region52
      $region51: #{tpu_custom_call.1} parent=5 // pred_region
        // Predicated region
        $region53: #{tpu_custom_call.1} parent=51 // pred_check
          %p317 = pneg %p40
        $region54: #{tpu_custom_call.1} parent=51 // pred_check_branch
          %319 = sbr.rel (%p317) target = $region56
        $region55: #{tpu_custom_call.1} parent=51 // pred_region
          %s320 = smul.u32 32, %s20
          %p321 = scmp.lt.s32.totalorder %s320, 63
          %s322 = scalar_select %p321, %s320, 63
          %s323 = smul.addr %s322, 8
          %s324 = scalar_lea.vmem %s0, %s323
          %s325 = smul.u32 32, %s20
        $region56: #{tpu_custom_call.1} parent=51 // pred_fallthru
          _
      $region52: #{tpu_custom_call.1} parent=5 // pred_fallthru
        _
      %p326 = scmp.le.s32.totalorder 1, %s20
      %p327 = scmp.lt.s32.totalorder %s20, 3
      %p328 = pnand %p326, %p327
      %p329 = pneg %p328
      // Predicated region
      $region57: #{tpu_custom_call.1} parent=5 // pred_check
        _
      $region58: #{tpu_custom_call.1} parent=5 // pred_check_branch
        %331 = sbr.rel (%p328) target = $region60
      $region59: #{tpu_custom_call.1} parent=5 // pred_region
        %s332 = ssub.s32 %s20, 1
        // Predicated region
        $region61: #{tpu_custom_call.1} parent=59 // pred_check
          %p333 = pneg %p130
        $region62: #{tpu_custom_call.1} parent=59 // pred_check_branch
          %335 = sbr.rel (%p333) target = $region64
        $region63: #{tpu_custom_call.1} parent=59 // pred_region
          %336 = dma.done [#allocation3], 2048
        $region64: #{tpu_custom_call.1} parent=59 // pred_fallthru
          _
        %s337 = smul.u32 32, %s25
        %p338 = scmp.lt.s32.totalorder %s337, 63
        %s339 = scalar_select %p338, %s337, 63
        %s340 = smul.addr %s339, 8
        %s341 = scalar_lea.vmem %s0, %s340
        %p342 = pneg %p46
        %p343 = pneg %p43
        %p344 = pneg %p67
        %p345 = pneg %p64
        %p346 = pneg %p88
        %p347 = pneg %p85
        %p348 = pneg %p109
        %p349 = pneg %p106
        %p350 = pneg %p130
        %p351 = pneg %p127
        %p352 = pneg %p151
        %p353 = pneg %p148
        %p354 = pneg %p172
        %p355 = pneg %p169
        %p356 = pneg %p193
        %p357 = pneg %p190
        %p358 = pneg %p214
        %p359 = pneg %p211
        %p360 = pneg %p235
        %p361 = pneg %p232
        %p362 = pneg %p261
        %p363 = pneg %p258
        %s364 = sand.u32 %s248, 1
        %s365 = scalar_lea.sflag [#allocation4], %s364
        %s366 = sand.u32 %s248, 1
        %s367 = smul.addr %s366, 1024
        %s368 = scalar_lea.vmem [#allocation5], %s367
        %s369 = smul.u32 32, %s25
        %p370 = scmp.lt.s32.totalorder %s369, 63
        %s371 = scalar_select %p370, %s369, 63
        %s372 = smul.addr %s371, 8
        %s373 = scalar_lea.vmem %s0, %s372
        %s374 = smul.u32 32, %s25
        %s375 = smul.u32 32, %s25
        %v377 = vld [vmem:[%s373] sm:$0xff]
        %v378 = vld [vmem:[%s373 + $0x8] sm:$0xff]
        %v379 = vld [vmem:[%s373 + $0x10] sm:$0xff]
        %v380 = vld [vmem:[%s373 + $0x18] sm:$0xff]
        %v381 = vld [vmem:[%s373 + $0x20] sm:$0xff]
        %v382 = vld [vmem:[%s373 + $0x28] sm:$0xff]
        %v383 = vld [vmem:[%s373 + $0x30] sm:$0xff]
        %v384 = vld [vmem:[%s373 + $0x38] sm:$0xff]
        %v385 = vld [vmem:[%s373 + $0x40] sm:$0xff]
        %v386 = vld [vmem:[%s373 + $0x48] sm:$0xff]
        %v387 = vld [vmem:[%s373 + $0x50] sm:$0xff]
        %v388 = vld [vmem:[%s373 + $0x58] sm:$0xff]
        %v389 = vld [vmem:[%s373 + $0x60] sm:$0xff]
        %v390 = vld [vmem:[%s373 + $0x68] sm:$0xff]
        %v391 = vld [vmem:[%s373 + $0x70] sm:$0xff]
        %v392 = vld [vmem:[%s373 + $0x78] sm:$0xff]
        %v393 = vld [vmem:[%s373 + $0x80] sm:$0xff]
        %v394 = vld [vmem:[%s373 + $0x88] sm:$0xff]
        %v395 = vld [vmem:[%s373 + $0x90] sm:$0xff]
        %v396 = vld [vmem:[%s373 + $0x98] sm:$0xff]
        %v397 = vld [vmem:[%s373 + $0xa0] sm:$0xff]
        %v398 = vld [vmem:[%s373 + $0xa8] sm:$0xff]
        %v399 = vld [vmem:[%s373 + $0xb0] sm:$0xff]
        %v400 = vld [vmem:[%s373 + $0xb8] sm:$0xff]
        %v401 = vld [vmem:[%s373 + $0xc0] sm:$0xff]
        %v402 = vld [vmem:[%s373 + $0xc8] sm:$0xff]
        %v403 = vld [vmem:[%s373 + $0xd0] sm:$0xff]
        %v404 = vld [vmem:[%s373 + $0xd8] sm:$0xff]
        %v405 = vld [vmem:[%s373 + $0xe0] sm:$0xff]
        %v406 = vld [vmem:[%s373 + $0xe8] sm:$0xff]
        %v407 = vld [vmem:[%s373 + $0xf0] sm:$0xff]
        %v408 = vld [vmem:[%s373 + $0xf8] sm:$0xff]
        %v409 = vpack.c.bf16 %v378, %v377
        %v410 = vpack.c.bf16 %v380, %v379
        %v411 = vpack.c.bf16 %v382, %v381
        %v412 = vpack.c.bf16 %v384, %v383
        %v413 = vpack.c.bf16 %v386, %v385
        %v414 = vpack.c.bf16 %v388, %v387
        %v415 = vpack.c.bf16 %v390, %v389
        %v416 = vpack.c.bf16 %v392, %v391
        %v417 = vpack.c.bf16 %v394, %v393
        %v418 = vpack.c.bf16 %v396, %v395
        %v419 = vpack.c.bf16 %v398, %v397
        %v420 = vpack.c.bf16 %v400, %v399
        %v421 = vpack.c.bf16 %v402, %v401
        %v422 = vpack.c.bf16 %v404, %v403
        %v423 = vpack.c.bf16 %v406, %v405
        %v424 = vpack.c.bf16 %v408, %v407
        %v425 = vld [vmem:[%s1] sm:$0x3]
        %v426 = vld [vmem:[%s2] sm:$0x1]
        %v428 = vlaneseq
        %v429 = vshrl.u32 %v428, 7
        %v430 = vsub.s32 0, %v429
        %v431 = vrot.slane %v426, %v430
        %vm433 = vcmask 23552
        %v435 = vsel %vm433, %v409, 0
        %v438 = vsel %vm433, %v410, 0
        %v441 = vsel %vm433, %v411, 0
        %v444 = vsel %vm433, %v412, 0
        %v447 = vsel %vm433, %v413, 0
        %v450 = vsel %vm433, %v414, 0
        %v453 = vsel %vm433, %v415, 0
        %v456 = vsel %vm433, %v416, 0
        %v459 = vsel %vm433, %v417, 0
        %v462 = vsel %vm433, %v418, 0
        %v465 = vsel %vm433, %v419, 0
        %v468 = vsel %vm433, %v420, 0
        %v471 = vsel %vm433, %v421, 0
        %v474 = vsel %vm433, %v422, 0
        %v477 = vsel %vm433, %v423, 0
        %v480 = vsel %vm433, %v424, 0
        %vm482 = vcmask 1040384
        %vm483 = vcmask 1041408
        %v484 = vsel %vm482, 4294967295, 65535
        %v485 = vsel %vm483, %v484, 0
        %v487 = vand.u32 %v425, %v485
        %489 = vmatprep.subr.bf16.mxu0 0
        %490 = vmatpush1.bf16.msra.mxu0 0
        %491 = vmatprep.subr.bf16.mxu0 0
        %492 = vmatpush1.bf16.msra.mxu0 0
        %493 = vmatprep.subr.bf16.mxu0 0
        %494 = vmatpush1.bf16.msra.mxu0 0
        %495 = vmatprep.subr.bf16.mxu0 0
        %496 = vmatpush1.bf16.msra.mxu0 0
        %497 = vmatprep.subr.bf16.mxu0 0
        %498 = vmatpush1.bf16.msra.mxu0 0
        %499 = vmatprep.subr.bf16.mxu0 0
        %500 = vmatpush1.bf16.msra.mxu0 0
        %501 = vmatprep.subr.bf16.mxu0 0
        %502 = vmatpush1.bf16.msra.mxu0 0
        %503 = vmatprep.subr.bf16.mxu0 0
        %504 = vmatpush1.bf16.msra.mxu0 %v487
        %505 = vmatprep.subr.bf16.mxu0 0
        %506 = vmatpush2.bf16.msra.mxu0 0
        %507 = vmatprep.subr.bf16.mxu0 0
        %508 = vmatpush2.bf16.msra.mxu0 0
        %509 = vmatprep.subr.bf16.mxu0 0
        %510 = vmatpush2.bf16.msra.mxu0 0
        %511 = vmatprep.subr.bf16.mxu0 0
        %512 = vmatpush2.bf16.msra.mxu0 0
        %513 = vmatprep.subr.bf16.mxu0 0
        %514 = vmatpush2.bf16.msra.mxu0 0
        %515 = vmatprep.subr.bf16.mxu0 0
        %516 = vmatpush2.bf16.msra.mxu0 0
        %517 = vmatprep.subr.bf16.mxu0 0
        %518 = vmatpush2.bf16.msra.mxu0 0
        %519 = vmatprep.subr.bf16.mxu0 0
        %520 = vmatpush2.bf16.msra.mxu0 0
        %521 = vmatprep.mubr.bf16.mxu0 0
        %522 = vmatmul.mubr.bf16.gmra.mxu0 %v435
        %v523 = vpop.f32.mrf.mxu0
        %v524 = vadd.f32 %v431, %v523
        %v525 = vpop.f32.mrf.mxu0
        %v526 = vpop.f32.mrf.mxu0
        %v527 = vadd.f32 %v431, %v526
        %v528 = vpop.f32.mrf.mxu0
        %529 = vmatprep.mubr.bf16.mxu0 0
        %530 = vmatmul.mubr.bf16.gmra.mxu0 %v438
        %v531 = vpop.f32.mrf.mxu0
        %v532 = vadd.f32 %v431, %v531
        %v533 = vpop.f32.mrf.mxu0
        %v534 = vpop.f32.mrf.mxu0
        %v535 = vadd.f32 %v431, %v534
        %v536 = vpop.f32.mrf.mxu0
        %537 = vmatprep.mubr.bf16.mxu0 0
        %538 = vmatmul.mubr.bf16.gmra.mxu0 %v441
        %v539 = vpop.f32.mrf.mxu0
        %v540 = vadd.f32 %v431, %v539
        %v541 = vpop.f32.mrf.mxu0
        %v542 = vpop.f32.mrf.mxu0
        %v543 = vadd.f32 %v431, %v542
        %v544 = vpop.f32.mrf.mxu0
        %545 = vmatprep.mubr.bf16.mxu0 0
        %546 = vmatmul.mubr.bf16.gmra.mxu0 %v444
        %v547 = vpop.f32.mrf.mxu0
        %v548 = vadd.f32 %v431, %v547
        %v549 = vpop.f32.mrf.mxu0
        %v550 = vpop.f32.mrf.mxu0
        %v551 = vadd.f32 %v431, %v550
        %v552 = vpop.f32.mrf.mxu0
        %553 = vmatprep.mubr.bf16.mxu0 0
        %554 = vmatmul.mubr.bf16.gmra.mxu0 %v447
        %v555 = vpop.f32.mrf.mxu0
        %v556 = vadd.f32 %v431, %v555
        %v557 = vpop.f32.mrf.mxu0
        %v558 = vpop.f32.mrf.mxu0
        %v559 = vadd.f32 %v431, %v558
        %v560 = vpop.f32.mrf.mxu0
        %561 = vmatprep.mubr.bf16.mxu0 0
        %562 = vmatmul.mubr.bf16.gmra.mxu0 %v450
        %v563 = vpop.f32.mrf.mxu0
        %v564 = vadd.f32 %v431, %v563
        %v565 = vpop.f32.mrf.mxu0
        %v566 = vpop.f32.mrf.mxu0
        %v567 = vadd.f32 %v431, %v566
        %v568 = vpop.f32.mrf.mxu0
        %569 = vmatprep.mubr.bf16.mxu0 0
        %570 = vmatmul.mubr.bf16.gmra.mxu0 %v453
        %v571 = vpop.f32.mrf.mxu0
        %v572 = vadd.f32 %v431, %v571
        %v573 = vpop.f32.mrf.mxu0
        %v574 = vpop.f32.mrf.mxu0
        %v575 = vadd.f32 %v431, %v574
        %v576 = vpop.f32.mrf.mxu0
        %577 = vmatprep.mubr.bf16.mxu0 0
        %578 = vmatmul.mubr.bf16.gmra.mxu0 %v456
        %v579 = vpop.f32.mrf.mxu0
        %v580 = vadd.f32 %v431, %v579
        %v581 = vpop.f32.mrf.mxu0
        %v582 = vpop.f32.mrf.mxu0
        %v583 = vadd.f32 %v431, %v582
        %v584 = vpop.f32.mrf.mxu0
        %585 = vmatprep.mubr.bf16.mxu0 0
        %586 = vmatmul.mubr.bf16.gmra.mxu0 %v459
        %v587 = vpop.f32.mrf.mxu0
        %v588 = vadd.f32 %v431, %v587
        %v589 = vpop.f32.mrf.mxu0
        %v590 = vpop.f32.mrf.mxu0
        %v591 = vadd.f32 %v431, %v590
        %v592 = vpop.f32.mrf.mxu0
        %593 = vmatprep.mubr.bf16.mxu0 0
        %594 = vmatmul.mubr.bf16.gmra.mxu0 %v462
        %v595 = vpop.f32.mrf.mxu0
        %v596 = vadd.f32 %v431, %v595
        %v597 = vpop.f32.mrf.mxu0
        %v598 = vpop.f32.mrf.mxu0
        %v599 = vadd.f32 %v431, %v598
        %v600 = vpop.f32.mrf.mxu0
        %601 = vmatprep.mubr.bf16.mxu0 0
        %602 = vmatmul.mubr.bf16.gmra.mxu0 %v465
        %v603 = vpop.f32.mrf.mxu0
        %v604 = vadd.f32 %v431, %v603
        %v605 = vpop.f32.mrf.mxu0
        %v606 = vpop.f32.mrf.mxu0
        %v607 = vadd.f32 %v431, %v606
        %v608 = vpop.f32.mrf.mxu0
        %609 = vmatprep.mubr.bf16.mxu0 0
        %610 = vmatmul.mubr.bf16.gmra.mxu0 %v468
        %v611 = vpop.f32.mrf.mxu0
        %v612 = vadd.f32 %v431, %v611
        %v613 = vpop.f32.mrf.mxu0
        %v614 = vpop.f32.mrf.mxu0
        %v615 = vadd.f32 %v431, %v614
        %v616 = vpop.f32.mrf.mxu0
        %617 = vmatprep.mubr.bf16.mxu0 0
        %618 = vmatmul.mubr.bf16.gmra.mxu0 %v471
        %v619 = vpop.f32.mrf.mxu0
        %v620 = vadd.f32 %v431, %v619
        %v621 = vpop.f32.mrf.mxu0
        %v622 = vpop.f32.mrf.mxu0
        %v623 = vadd.f32 %v431, %v622
        %v624 = vpop.f32.mrf.mxu0
        %625 = vmatprep.mubr.bf16.mxu0 0
        %626 = vmatmul.mubr.bf16.gmra.mxu0 %v474
        %v627 = vpop.f32.mrf.mxu0
        %v628 = vadd.f32 %v431, %v627
        %v629 = vpop.f32.mrf.mxu0
        %v630 = vpop.f32.mrf.mxu0
        %v631 = vadd.f32 %v431, %v630
        %v632 = vpop.f32.mrf.mxu0
        %633 = vmatprep.mubr.bf16.mxu0 0
        %634 = vmatmul.mubr.bf16.gmra.mxu0 %v477
        %v635 = vpop.f32.mrf.mxu0
        %v636 = vadd.f32 %v431, %v635
        %v637 = vpop.f32.mrf.mxu0
        %v638 = vpop.f32.mrf.mxu0
        %v639 = vadd.f32 %v431, %v638
        %v640 = vpop.f32.mrf.mxu0
        %641 = vmatprep.mubr.bf16.mxu0 0
        %642 = vmatmul.mubr.bf16.gmra.mxu0 %v480
        %v643 = vpop.f32.mrf.mxu0
        %v644 = vadd.f32 %v431, %v643
        %v645 = vpop.f32.mrf.mxu0
        %v646 = vpop.f32.mrf.mxu0
        %v647 = vadd.f32 %v431, %v646
        %v648 = vpop.f32.mrf.mxu0
        %649 = vdwg.mxu0
        %v650 = vmax.f32 %v524, 0.0
        %v651 = vmax.f32 %v527, 0.0
        %v652 = vmax.f32 %v532, 0.0
        %v653 = vmax.f32 %v535, 0.0
        %v654 = vmax.f32 %v540, 0.0
        %v655 = vmax.f32 %v543, 0.0
        %v656 = vmax.f32 %v548, 0.0
        %v657 = vmax.f32 %v551, 0.0
        %v658 = vmax.f32 %v556, 0.0
        %v659 = vmax.f32 %v559, 0.0
        %v660 = vmax.f32 %v564, 0.0
        %v661 = vmax.f32 %v567, 0.0
        %v662 = vmax.f32 %v572, 0.0
        %v663 = vmax.f32 %v575, 0.0
        %v664 = vmax.f32 %v580, 0.0
        %v665 = vmax.f32 %v583, 0.0
        %v666 = vmax.f32 %v588, 0.0
        %v667 = vmax.f32 %v591, 0.0
        %v668 = vmax.f32 %v596, 0.0
        %v669 = vmax.f32 %v599, 0.0
        %v670 = vmax.f32 %v604, 0.0
        %v671 = vmax.f32 %v607, 0.0
        %v672 = vmax.f32 %v612, 0.0
        %v673 = vmax.f32 %v615, 0.0
        %v674 = vmax.f32 %v620, 0.0
        %v675 = vmax.f32 %v623, 0.0
        %v676 = vmax.f32 %v628, 0.0
        %v677 = vmax.f32 %v631, 0.0
        %v678 = vmax.f32 %v636, 0.0
        %v679 = vmax.f32 %v639, 0.0
        %v680 = vmax.f32 %v644, 0.0
        %v681 = vmax.f32 %v647, 0.0
        %v682 = vld [vmem:[%s3] sm:$0x1]
        %v684 = vlaneseq
        %v685 = vshrl.u32 %v684, 7
        %v686 = vsub.s32 0, %v685
        %v687 = vrot.slane %v682, %v686
        %v689 = vadd.f32 %v650, %v687
        %v690 = vadd.f32 %v651, %v687
        %v691 = vadd.f32 %v652, %v687
        %v692 = vadd.f32 %v653, %v687
        %v693 = vadd.f32 %v654, %v687
        %v694 = vadd.f32 %v655, %v687
        %v695 = vadd.f32 %v656, %v687
        %v696 = vadd.f32 %v657, %v687
        %v697 = vadd.f32 %v658, %v687
        %v698 = vadd.f32 %v659, %v687
        %v699 = vadd.f32 %v660, %v687
        %v700 = vadd.f32 %v661, %v687
        %v701 = vadd.f32 %v662, %v687
        %v702 = vadd.f32 %v663, %v687
        %v703 = vadd.f32 %v664, %v687
        %v704 = vadd.f32 %v665, %v687
        %v705 = vadd.f32 %v666, %v687
        %v706 = vadd.f32 %v667, %v687
        %v707 = vadd.f32 %v668, %v687
        %v708 = vadd.f32 %v669, %v687
        %v709 = vadd.f32 %v670, %v687
        %v710 = vadd.f32 %v671, %v687
        %v711 = vadd.f32 %v672, %v687
        %v712 = vadd.f32 %v673, %v687
        %v713 = vadd.f32 %v674, %v687
        %v714 = vadd.f32 %v675, %v687
        %v715 = vadd.f32 %v676, %v687
        %v716 = vadd.f32 %v677, %v687
        %v717 = vadd.f32 %v678, %v687
        %v718 = vadd.f32 %v679, %v687
        %v719 = vadd.f32 %v680, %v687
        %v720 = vadd.f32 %v681, %v687
        %v721 = vpack.c.bf16 %v690, %v689
        %v722 = vpack.c.bf16 %v692, %v691
        %v723 = vpack.c.bf16 %v694, %v693
        %v724 = vpack.c.bf16 %v696, %v695
        %v725 = vpack.c.bf16 %v698, %v697
        %v726 = vpack.c.bf16 %v700, %v699
        %v727 = vpack.c.bf16 %v702, %v701
        %v728 = vpack.c.bf16 %v704, %v703
        %v729 = vpack.c.bf16 %v706, %v705
        %v730 = vpack.c.bf16 %v708, %v707
        %v731 = vpack.c.bf16 %v710, %v709
        %v732 = vpack.c.bf16 %v712, %v711
        %v733 = vpack.c.bf16 %v714, %v713
        %v734 = vpack.c.bf16 %v716, %v715
        %v735 = vpack.c.bf16 %v718, %v717
        %v736 = vpack.c.bf16 %v720, %v719
        %v737 = vld [vmem:[#allocation2] sm:$0xff]
        %v738 = vld [vmem:[#allocation2 + $0x8] sm:$0xff]
        %v739 = vld [vmem:[#allocation2 + $0x10] sm:$0xff]
        %v740 = vld [vmem:[#allocation2 + $0x18] sm:$0xff]
        %v741 = vld [vmem:[#allocation2 + $0x20] sm:$0xff]
        %v742 = vld [vmem:[#allocation2 + $0x28] sm:$0xff]
        %v743 = vld [vmem:[#allocation2 + $0x30] sm:$0xff]
        %v744 = vld [vmem:[#allocation2 + $0x38] sm:$0xff]
        %v745 = vld [vmem:[#allocation2 + $0x40] sm:$0xff]
        %v746 = vld [vmem:[#allocation2 + $0x48] sm:$0xff]
        %v747 = vld [vmem:[#allocation2 + $0x50] sm:$0xff]
        %v748 = vld [vmem:[#allocation2 + $0x58] sm:$0xff]
        %v749 = vld [vmem:[#allocation2 + $0x60] sm:$0xff]
        %v750 = vld [vmem:[#allocation2 + $0x68] sm:$0xff]
        %v751 = vld [vmem:[#allocation2 + $0x70] sm:$0xff]
        %v752 = vld [vmem:[#allocation2 + $0x78] sm:$0xff]
        %v753 = vld [vmem:[%s5] sm:$0x3]
        %v755 = vlaneseq
        %v756 = vshrl.u32 %v755, 7
        %v757 = vsub.s32 0, %v756
        %v758 = vrot.slane %v753, %v757
        %v759 = vlaneseq
        %v760 = vshrl.u32 %v759, 7
        %v761 = vsub.s32 1, %v760
        %v762 = vrot.slane %v753, %v761
        %v781 = vunpack.c.l.b16 %v737
        %v782 = vunpack.c.h.b16 %v737
        %v783 = vunpack.c.l.b16 %v738
        %v784 = vunpack.c.h.b16 %v738
        %v785 = vunpack.c.l.b16 %v739
        %v786 = vunpack.c.h.b16 %v739
        %v787 = vunpack.c.l.b16 %v740
        %v788 = vunpack.c.h.b16 %v740
        %v789 = vunpack.c.l.b16 %v741
        %v790 = vunpack.c.h.b16 %v741
        %v791 = vunpack.c.l.b16 %v742
        %v792 = vunpack.c.h.b16 %v742
        %v793 = vunpack.c.l.b16 %v743
        %v794 = vunpack.c.h.b16 %v743
        %v795 = vunpack.c.l.b16 %v744
        %v796 = vunpack.c.h.b16 %v744
        %v797 = vunpack.c.l.b16 %v745
        %v798 = vunpack.c.h.b16 %v745
        %v799 = vunpack.c.l.b16 %v746
        %v800 = vunpack.c.h.b16 %v746
        %v801 = vunpack.c.l.b16 %v747
        %v802 = vunpack.c.h.b16 %v747
        %v803 = vunpack.c.l.b16 %v748
        %v804 = vunpack.c.h.b16 %v748
        %v805 = vunpack.c.l.b16 %v749
        %v806 = vunpack.c.h.b16 %v749
        %v807 = vunpack.c.l.b16 %v750
        %v808 = vunpack.c.h.b16 %v750
        %v809 = vunpack.c.l.b16 %v751
        %v810 = vunpack.c.h.b16 %v751
        %v811 = vunpack.c.l.b16 %v752
        %v812 = vunpack.c.h.b16 %v752
        %v813 = vpack.c.b16 %v783, %v781
        %v814 = vpack.c.b16 %v784, %v782
        %v815 = vpack.c.b16 %v787, %v785
        %v816 = vpack.c.b16 %v788, %v786
        %v817 = vpack.c.b16 %v791, %v789
        %v818 = vpack.c.b16 %v792, %v790
        %v819 = vpack.c.b16 %v795, %v793
        %v820 = vpack.c.b16 %v796, %v794
        %v821 = vpack.c.b16 %v799, %v797
        %v822 = vpack.c.b16 %v800, %v798
        %v823 = vpack.c.b16 %v803, %v801
        %v824 = vpack.c.b16 %v804, %v802
        %v825 = vpack.c.b16 %v807, %v805
        %v826 = vpack.c.b16 %v808, %v806
        %v827 = vpack.c.b16 %v811, %v809
        %v828 = vpack.c.b16 %v812, %v810
        %845 = vmatprep.subr.bf16.mxu0 %v828
        %846 = vmatpush1.bf16.msra.mxu0 %v827
        %847 = vmatprep.subr.bf16.mxu0 %v826
        %848 = vmatpush1.bf16.msra.mxu0 %v825
        %849 = vmatprep.subr.bf16.mxu0 %v824
        %850 = vmatpush1.bf16.msra.mxu0 %v823
        %851 = vmatprep.subr.bf16.mxu0 %v822
        %852 = vmatpush1.bf16.msra.mxu0 %v821
        %853 = vmatprep.subr.bf16.mxu0 %v820
        %854 = vmatpush1.bf16.msra.mxu0 %v819
        %855 = vmatprep.subr.bf16.mxu0 %v818
        %856 = vmatpush1.bf16.msra.mxu0 %v817
        %857 = vmatprep.subr.bf16.mxu0 %v816
        %858 = vmatpush1.bf16.msra.mxu0 %v815
        %859 = vmatprep.subr.bf16.mxu0 %v814
        %860 = vmatpush1.bf16.msra.mxu0 %v813
        %861 = vmatprep.subr.bf16.mxu0 0
        %862 = vmatpush2.bf16.msra.mxu0 0
        %863 = vmatprep.subr.bf16.mxu0 0
        %864 = vmatpush2.bf16.msra.mxu0 0
        %865 = vmatprep.subr.bf16.mxu0 0
        %866 = vmatpush2.bf16.msra.mxu0 0
        %867 = vmatprep.subr.bf16.mxu0 0
        %868 = vmatpush2.bf16.msra.mxu0 0
        %869 = vmatprep.subr.bf16.mxu0 0
        %870 = vmatpush2.bf16.msra.mxu0 0
        %871 = vmatprep.subr.bf16.mxu0 0
        %872 = vmatpush2.bf16.msra.mxu0 0
        %873 = vmatprep.subr.bf16.mxu0 0
        %874 = vmatpush2.bf16.msra.mxu0 0
        %875 = vmatprep.subr.bf16.mxu0 0
        %876 = vmatpush2.bf16.msra.mxu0 0
        %877 = vmatprep.mubr.bf16.mxu0 0
        %878 = vmatmul.mubr.bf16.gmra.mxu0 %v721
        %v879 = vpop.f32.mrf.mxu0
        %v880 = vadd.f32 %v758, %v879
        %v881 = vpop.f32.mrf.mxu0
        %v882 = vadd.f32 %v762, %v881
        %v883 = vpop.f32.mrf.mxu0
        %v884 = vadd.f32 %v758, %v883
        %v885 = vpop.f32.mrf.mxu0
        %v886 = vadd.f32 %v762, %v885
        %887 = vmatprep.mubr.bf16.mxu0 0
        %888 = vmatmul.mubr.bf16.gmra.mxu0 %v722
        %v889 = vpop.f32.mrf.mxu0
        %v890 = vadd.f32 %v758, %v889
        %v891 = vpop.f32.mrf.mxu0
        %v892 = vadd.f32 %v762, %v891
        %v893 = vpop.f32.mrf.mxu0
        %v894 = vadd.f32 %v758, %v893
        %v895 = vpop.f32.mrf.mxu0
        %v896 = vadd.f32 %v762, %v895
        %897 = vmatprep.mubr.bf16.mxu0 0
        %898 = vmatmul.mubr.bf16.gmra.mxu0 %v723
        %v899 = vpop.f32.mrf.mxu0
        %v900 = vadd.f32 %v758, %v899
        %v901 = vpop.f32.mrf.mxu0
        %v902 = vadd.f32 %v762, %v901
        %v903 = vpop.f32.mrf.mxu0
        %v904 = vadd.f32 %v758, %v903
        %v905 = vpop.f32.mrf.mxu0
        %v906 = vadd.f32 %v762, %v905
        %907 = vmatprep.mubr.bf16.mxu0 0
        %908 = vmatmul.mubr.bf16.gmra.mxu0 %v724
        %v909 = vpop.f32.mrf.mxu0
        %v910 = vadd.f32 %v758, %v909
        %v911 = vpop.f32.mrf.mxu0
        %v912 = vadd.f32 %v762, %v911
        %v913 = vpop.f32.mrf.mxu0
        %v914 = vadd.f32 %v758, %v913
        %v915 = vpop.f32.mrf.mxu0
        %v916 = vadd.f32 %v762, %v915
        %917 = vmatprep.mubr.bf16.mxu0 0
        %918 = vmatmul.mubr.bf16.gmra.mxu0 %v725
        %v919 = vpop.f32.mrf.mxu0
        %v920 = vadd.f32 %v758, %v919
        %v921 = vpop.f32.mrf.mxu0
        %v922 = vadd.f32 %v762, %v921
        %v923 = vpop.f32.mrf.mxu0
        %v924 = vadd.f32 %v758, %v923
        %v925 = vpop.f32.mrf.mxu0
        %v926 = vadd.f32 %v762, %v925
        %927 = vmatprep.mubr.bf16.mxu0 0
        %928 = vmatmul.mubr.bf16.gmra.mxu0 %v726
        %v929 = vpop.f32.mrf.mxu0
        %v930 = vadd.f32 %v758, %v929
        %v931 = vpop.f32.mrf.mxu0
        %v932 = vadd.f32 %v762, %v931
        %v933 = vpop.f32.mrf.mxu0
        %v934 = vadd.f32 %v758, %v933
        %v935 = vpop.f32.mrf.mxu0
        %v936 = vadd.f32 %v762, %v935
        %937 = vmatprep.mubr.bf16.mxu0 0
        %938 = vmatmul.mubr.bf16.gmra.mxu0 %v727
        %v939 = vpop.f32.mrf.mxu0
        %v940 = vadd.f32 %v758, %v939
        %v941 = vpop.f32.mrf.mxu0
        %v942 = vadd.f32 %v762, %v941
        %v943 = vpop.f32.mrf.mxu0
        %v944 = vadd.f32 %v758, %v943
        %v945 = vpop.f32.mrf.mxu0
        %v946 = vadd.f32 %v762, %v945
        %947 = vmatprep.mubr.bf16.mxu0 0
        %948 = vmatmul.mubr.bf16.gmra.mxu0 %v728
        %v949 = vpop.f32.mrf.mxu0
        %v950 = vadd.f32 %v758, %v949
        %v951 = vpop.f32.mrf.mxu0
        %v952 = vadd.f32 %v762, %v951
        %v953 = vpop.f32.mrf.mxu0
        %v954 = vadd.f32 %v758, %v953
        %v955 = vpop.f32.mrf.mxu0
        %v956 = vadd.f32 %v762, %v955
        %957 = vmatprep.mubr.bf16.mxu0 0
        %958 = vmatmul.mubr.bf16.gmra.mxu0 %v729
        %v959 = vpop.f32.mrf.mxu0
        %v960 = vadd.f32 %v758, %v959
        %v961 = vpop.f32.mrf.mxu0
        %v962 = vadd.f32 %v762, %v961
        %v963 = vpop.f32.mrf.mxu0
        %v964 = vadd.f32 %v758, %v963
        %v965 = vpop.f32.mrf.mxu0
        %v966 = vadd.f32 %v762, %v965
        %967 = vmatprep.mubr.bf16.mxu0 0
        %968 = vmatmul.mubr.bf16.gmra.mxu0 %v730
        %v969 = vpop.f32.mrf.mxu0
        %v970 = vadd.f32 %v758, %v969
        %v971 = vpop.f32.mrf.mxu0
        %v972 = vadd.f32 %v762, %v971
        %v973 = vpop.f32.mrf.mxu0
        %v974 = vadd.f32 %v758, %v973
        %v975 = vpop.f32.mrf.mxu0
        %v976 = vadd.f32 %v762, %v975
        %977 = vmatprep.mubr.bf16.mxu0 0
        %978 = vmatmul.mubr.bf16.gmra.mxu0 %v731
        %v979 = vpop.f32.mrf.mxu0
        %v980 = vadd.f32 %v758, %v979
        %v981 = vpop.f32.mrf.mxu0
        %v982 = vadd.f32 %v762, %v981
        %v983 = vpop.f32.mrf.mxu0
        %v984 = vadd.f32 %v758, %v983
        %v985 = vpop.f32.mrf.mxu0
        %v986 = vadd.f32 %v762, %v985
        %987 = vmatprep.mubr.bf16.mxu0 0
        %988 = vmatmul.mubr.bf16.gmra.mxu0 %v732
        %v989 = vpop.f32.mrf.mxu0
        %v990 = vadd.f32 %v758, %v989
        %v991 = vpop.f32.mrf.mxu0
        %v992 = vadd.f32 %v762, %v991
        %v993 = vpop.f32.mrf.mxu0
        %v994 = vadd.f32 %v758, %v993
        %v995 = vpop.f32.mrf.mxu0
        %v996 = vadd.f32 %v762, %v995
        %997 = vmatprep.mubr.bf16.mxu0 0
        %998 = vmatmul.mubr.bf16.gmra.mxu0 %v733
        %v999 = vpop.f32.mrf.mxu0
        %v1000 = vadd.f32 %v758, %v999
        %v1001 = vpop.f32.mrf.mxu0
        %v1002 = vadd.f32 %v762, %v1001
        %v1003 = vpop.f32.mrf.mxu0
        %v1004 = vadd.f32 %v758, %v1003
        %v1005 = vpop.f32.mrf.mxu0
        %v1006 = vadd.f32 %v762, %v1005
        %1007 = vmatprep.mubr.bf16.mxu0 0
        %1008 = vmatmul.mubr.bf16.gmra.mxu0 %v734
        %v1009 = vpop.f32.mrf.mxu0
        %v1010 = vadd.f32 %v758, %v1009
        %v1011 = vpop.f32.mrf.mxu0
        %v1012 = vadd.f32 %v762, %v1011
        %v1013 = vpop.f32.mrf.mxu0
        %v1014 = vadd.f32 %v758, %v1013
        %v1015 = vpop.f32.mrf.mxu0
        %v1016 = vadd.f32 %v762, %v1015
        %1017 = vmatprep.mubr.bf16.mxu0 0
        %1018 = vmatmul.mubr.bf16.gmra.mxu0 %v735
        %v1019 = vpop.f32.mrf.mxu0
        %v1020 = vadd.f32 %v758, %v1019
        %v1021 = vpop.f32.mrf.mxu0
        %v1022 = vadd.f32 %v762, %v1021
        %v1023 = vpop.f32.mrf.mxu0
        %v1024 = vadd.f32 %v758, %v1023
        %v1025 = vpop.f32.mrf.mxu0
        %v1026 = vadd.f32 %v762, %v1025
        %1027 = vmatprep.mubr.bf16.mxu0 0
        %1028 = vmatmul.mubr.bf16.gmra.mxu0 %v736
        %v1029 = vpop.f32.mrf.mxu0
        %v1030 = vadd.f32 %v758, %v1029
        %v1031 = vpop.f32.mrf.mxu0
        %v1032 = vadd.f32 %v762, %v1031
        %v1033 = vpop.f32.mrf.mxu0
        %v1034 = vadd.f32 %v758, %v1033
        %v1035 = vpop.f32.mrf.mxu0
        %v1036 = vadd.f32 %v762, %v1035
        %1037 = vdwg.mxu0
        %v1038 = vmax.f32 %v880, 0.0
        %v1039 = vmax.f32 %v882, 0.0
        %v1040 = vmax.f32 %v884, 0.0
        %v1041 = vmax.f32 %v886, 0.0
        %v1042 = vmax.f32 %v890, 0.0
        %v1043 = vmax.f32 %v892, 0.0
        %v1044 = vmax.f32 %v894, 0.0
        %v1045 = vmax.f32 %v896, 0.0
        %v1046 = vmax.f32 %v900, 0.0
        %v1047 = vmax.f32 %v902, 0.0
        %v1048 = vmax.f32 %v904, 0.0
        %v1049 = vmax.f32 %v906, 0.0
        %v1050 = vmax.f32 %v910, 0.0
        %v1051 = vmax.f32 %v912, 0.0
        %v1052 = vmax.f32 %v914, 0.0
        %v1053 = vmax.f32 %v916, 0.0
        %v1054 = vmax.f32 %v920, 0.0
        %v1055 = vmax.f32 %v922, 0.0
        %v1056 = vmax.f32 %v924, 0.0
        %v1057 = vmax.f32 %v926, 0.0
        %v1058 = vmax.f32 %v930, 0.0
        %v1059 = vmax.f32 %v932, 0.0
        %v1060 = vmax.f32 %v934, 0.0
        %v1061 = vmax.f32 %v936, 0.0
        %v1062 = vmax.f32 %v940, 0.0
        %v1063 = vmax.f32 %v942, 0.0
        %v1064 = vmax.f32 %v944, 0.0
        %v1065 = vmax.f32 %v946, 0.0
        %v1066 = vmax.f32 %v950, 0.0
        %v1067 = vmax.f32 %v952, 0.0
        %v1068 = vmax.f32 %v954, 0.0
        %v1069 = vmax.f32 %v956, 0.0
        %v1070 = vmax.f32 %v960, 0.0
        %v1071 = vmax.f32 %v962, 0.0
        %v1072 = vmax.f32 %v964, 0.0
        %v1073 = vmax.f32 %v966, 0.0
        %v1074 = vmax.f32 %v970, 0.0
        %v1075 = vmax.f32 %v972, 0.0
        %v1076 = vmax.f32 %v974, 0.0
        %v1077 = vmax.f32 %v976, 0.0
        %v1078 = vmax.f32 %v980, 0.0
        %v1079 = vmax.f32 %v982, 0.0
        %v1080 = vmax.f32 %v984, 0.0
        %v1081 = vmax.f32 %v986, 0.0
        %v1082 = vmax.f32 %v990, 0.0
        %v1083 = vmax.f32 %v992, 0.0
        %v1084 = vmax.f32 %v994, 0.0
        %v1085 = vmax.f32 %v996, 0.0
        %v1086 = vmax.f32 %v1000, 0.0
        %v1087 = vmax.f32 %v1002, 0.0
        %v1088 = vmax.f32 %v1004, 0.0
        %v1089 = vmax.f32 %v1006, 0.0
        %v1090 = vmax.f32 %v1010, 0.0
        %v1091 = vmax.f32 %v1012, 0.0
        %v1092 = vmax.f32 %v1014, 0.0
        %v1093 = vmax.f32 %v1016, 0.0
        %v1094 = vmax.f32 %v1020, 0.0
        %v1095 = vmax.f32 %v1022, 0.0
        %v1096 = vmax.f32 %v1024, 0.0
        %v1097 = vmax.f32 %v1026, 0.0
        %v1098 = vmax.f32 %v1030, 0.0
        %v1099 = vmax.f32 %v1032, 0.0
        %v1100 = vmax.f32 %v1034, 0.0
        %v1101 = vmax.f32 %v1036, 0.0
        %v1102 = vld [vmem:[%s6] sm:$0x3]
        %v1104 = vlaneseq
        %v1105 = vshrl.u32 %v1104, 7
        %v1106 = vsub.s32 0, %v1105
        %v1107 = vrot.slane %v1102, %v1106
        %v1108 = vlaneseq
        %v1109 = vshrl.u32 %v1108, 7
        %v1110 = vsub.s32 1, %v1109
        %v1111 = vrot.slane %v1102, %v1110
        %v1114 = vadd.f32 %v1038, %v1107
        %v1115 = vadd.f32 %v1039, %v1111
        %v1116 = vadd.f32 %v1040, %v1107
        %v1117 = vadd.f32 %v1041, %v1111
        %v1118 = vadd.f32 %v1042, %v1107
        %v1119 = vadd.f32 %v1043, %v1111
        %v1120 = vadd.f32 %v1044, %v1107
        %v1121 = vadd.f32 %v1045, %v1111
        %v1122 = vadd.f32 %v1046, %v1107
        %v1123 = vadd.f32 %v1047, %v1111
        %v1124 = vadd.f32 %v1048, %v1107
        %v1125 = vadd.f32 %v1049, %v1111
        %v1126 = vadd.f32 %v1050, %v1107
        %v1127 = vadd.f32 %v1051, %v1111
        %v1128 = vadd.f32 %v1052, %v1107
        %v1129 = vadd.f32 %v1053, %v1111
        %v1130 = vadd.f32 %v1054, %v1107
        %v1131 = vadd.f32 %v1055, %v1111
        %v1132 = vadd.f32 %v1056, %v1107
        %v1133 = vadd.f32 %v1057, %v1111
        %v1134 = vadd.f32 %v1058, %v1107
        %v1135 = vadd.f32 %v1059, %v1111
        %v1136 = vadd.f32 %v1060, %v1107
        %v1137 = vadd.f32 %v1061, %v1111
        %v1138 = vadd.f32 %v1062, %v1107
        %v1139 = vadd.f32 %v1063, %v1111
        %v1140 = vadd.f32 %v1064, %v1107
        %v1141 = vadd.f32 %v1065, %v1111
        %v1142 = vadd.f32 %v1066, %v1107
        %v1143 = vadd.f32 %v1067, %v1111
        %v1144 = vadd.f32 %v1068, %v1107
        %v1145 = vadd.f32 %v1069, %v1111
        %v1146 = vadd.f32 %v1070, %v1107
        %v1147 = vadd.f32 %v1071, %v1111
        %v1148 = vadd.f32 %v1072, %v1107
        %v1149 = vadd.f32 %v1073, %v1111
        %v1150 = vadd.f32 %v1074, %v1107
        %v1151 = vadd.f32 %v1075, %v1111
        %v1152 = vadd.f32 %v1076, %v1107
        %v1153 = vadd.f32 %v1077, %v1111
        %v1154 = vadd.f32 %v1078, %v1107
        %v1155 = vadd.f32 %v1079, %v1111
        %v1156 = vadd.f32 %v1080, %v1107
        %v1157 = vadd.f32 %v1081, %v1111
        %v1158 = vadd.f32 %v1082, %v1107
        %v1159 = vadd.f32 %v1083, %v1111
        %v1160 = vadd.f32 %v1084, %v1107
        %v1161 = vadd.f32 %v1085, %v1111
        %v1162 = vadd.f32 %v1086, %v1107
        %v1163 = vadd.f32 %v1087, %v1111
        %v1164 = vadd.f32 %v1088, %v1107
        %v1165 = vadd.f32 %v1089, %v1111
        %v1166 = vadd.f32 %v1090, %v1107
        %v1167 = vadd.f32 %v1091, %v1111
        %v1168 = vadd.f32 %v1092, %v1107
        %v1169 = vadd.f32 %v1093, %v1111
        %v1170 = vadd.f32 %v1094, %v1107
        %v1171 = vadd.f32 %v1095, %v1111
        %v1172 = vadd.f32 %v1096, %v1107
        %v1173 = vadd.f32 %v1097, %v1111
        %v1174 = vadd.f32 %v1098, %v1107
        %v1175 = vadd.f32 %v1099, %v1111
        %v1176 = vadd.f32 %v1100, %v1107
        %v1177 = vadd.f32 %v1101, %v1111
        %v1178 = vpack.c.bf16 %v1116, %v1114
        %v1179 = vpack.c.bf16 %v1117, %v1115
        %v1180 = vpack.c.bf16 %v1120, %v1118
        %v1181 = vpack.c.bf16 %v1121, %v1119
        %v1182 = vpack.c.bf16 %v1124, %v1122
        %v1183 = vpack.c.bf16 %v1125, %v1123
        %v1184 = vpack.c.bf16 %v1128, %v1126
        %v1185 = vpack.c.bf16 %v1129, %v1127
        %v1186 = vpack.c.bf16 %v1132, %v1130
        %v1187 = vpack.c.bf16 %v1133, %v1131
        %v1188 = vpack.c.bf16 %v1136, %v1134
        %v1189 = vpack.c.bf16 %v1137, %v1135
        %v1190 = vpack.c.bf16 %v1140, %v1138
        %v1191 = vpack.c.bf16 %v1141, %v1139
        %v1192 = vpack.c.bf16 %v1144, %v1142
        %v1193 = vpack.c.bf16 %v1145, %v1143
        %v1194 = vpack.c.bf16 %v1148, %v1146
        %v1195 = vpack.c.bf16 %v1149, %v1147
        %v1196 = vpack.c.bf16 %v1152, %v1150
        %v1197 = vpack.c.bf16 %v1153, %v1151
        %v1198 = vpack.c.bf16 %v1156, %v1154
        %v1199 = vpack.c.bf16 %v1157, %v1155
        %v1200 = vpack.c.bf16 %v1160, %v1158
        %v1201 = vpack.c.bf16 %v1161, %v1159
        %v1202 = vpack.c.bf16 %v1164, %v1162
        %v1203 = vpack.c.bf16 %v1165, %v1163
        %v1204 = vpack.c.bf16 %v1168, %v1166
        %v1205 = vpack.c.bf16 %v1169, %v1167
        %v1206 = vpack.c.bf16 %v1172, %v1170
        %v1207 = vpack.c.bf16 %v1173, %v1171
        %v1208 = vpack.c.bf16 %v1176, %v1174
        %v1209 = vpack.c.bf16 %v1177, %v1175
        %v1210 = vld [vmem:[%s7] sm:$0xff]
        %v1211 = vld [vmem:[%s7 + $0x8] sm:$0xff]
        %v1212 = vld [vmem:[%s7 + $0x10] sm:$0xff]
        %v1213 = vld [vmem:[%s7 + $0x18] sm:$0xff]
        %v1214 = vld [vmem:[%s7 + $0x20] sm:$0xff]
        %v1215 = vld [vmem:[%s7 + $0x28] sm:$0xff]
        %v1216 = vld [vmem:[%s7 + $0x30] sm:$0xff]
        %v1217 = vld [vmem:[%s7 + $0x38] sm:$0xff]
        %v1218 = vld [vmem:[%s7 + $0x40] sm:$0xff]
        %v1219 = vld [vmem:[%s7 + $0x48] sm:$0xff]
        %v1220 = vld [vmem:[%s7 + $0x50] sm:$0xff]
        %v1221 = vld [vmem:[%s7 + $0x58] sm:$0xff]
        %v1222 = vld [vmem:[%s7 + $0x60] sm:$0xff]
        %v1223 = vld [vmem:[%s7 + $0x68] sm:$0xff]
        %v1224 = vld [vmem:[%s7 + $0x70] sm:$0xff]
        %v1225 = vld [vmem:[%s7 + $0x78] sm:$0xff]
        %v1226 = vld [vmem:[%s7 + $0x80] sm:$0xff]
        %v1227 = vld [vmem:[%s7 + $0x88] sm:$0xff]
        %v1228 = vld [vmem:[%s7 + $0x90] sm:$0xff]
        %v1229 = vld [vmem:[%s7 + $0x98] sm:$0xff]
        %v1230 = vld [vmem:[%s7 + $0xa0] sm:$0xff]
        %v1231 = vld [vmem:[%s7 + $0xa8] sm:$0xff]
        %v1232 = vld [vmem:[%s7 + $0xb0] sm:$0xff]
        %v1233 = vld [vmem:[%s7 + $0xb8] sm:$0xff]
        %v1234 = vld [vmem:[%s7 + $0xc0] sm:$0xff]
        %v1235 = vld [vmem:[%s7 + $0xc8] sm:$0xff]
        %v1236 = vld [vmem:[%s7 + $0xd0] sm:$0xff]
        %v1237 = vld [vmem:[%s7 + $0xd8] sm:$0xff]
        %v1238 = vld [vmem:[%s7 + $0xe0] sm:$0xff]
        %v1239 = vld [vmem:[%s7 + $0xe8] sm:$0xff]
        %v1240 = vld [vmem:[%s7 + $0xf0] sm:$0xff]
        %v1241 = vld [vmem:[%s7 + $0xf8] sm:$0xff]
        %v1242 = vld [vmem:[%s7 + $0x100] sm:$0xff]
        %v1243 = vld [vmem:[%s7 + $0x108] sm:$0xff]
        %v1244 = vld [vmem:[%s7 + $0x110] sm:$0xff]
        %v1245 = vld [vmem:[%s7 + $0x118] sm:$0xff]
        %v1246 = vld [vmem:[%s7 + $0x120] sm:$0xff]
        %v1247 = vld [vmem:[%s7 + $0x128] sm:$0xff]
        %v1248 = vld [vmem:[%s7 + $0x130] sm:$0xff]
        %v1249 = vld [vmem:[%s7 + $0x138] sm:$0xff]
        %v1250 = vld [vmem:[%s7 + $0x140] sm:$0xff]
        %v1251 = vld [vmem:[%s7 + $0x148] sm:$0xff]
        %v1252 = vld [vmem:[%s7 + $0x150] sm:$0xff]
        %v1253 = vld [vmem:[%s7 + $0x158] sm:$0xff]
        %v1254 = vld [vmem:[%s7 + $0x160] sm:$0xff]
        %v1255 = vld [vmem:[%s7 + $0x168] sm:$0xff]
        %v1256 = vld [vmem:[%s7 + $0x170] sm:$0xff]
        %v1257 = vld [vmem:[%s7 + $0x178] sm:$0xff]
        %v1258 = vld [vmem:[%s7 + $0x180] sm:$0xff]
        %v1259 = vld [vmem:[%s7 + $0x188] sm:$0xff]
        %v1260 = vld [vmem:[%s7 + $0x190] sm:$0xff]
        %v1261 = vld [vmem:[%s7 + $0x198] sm:$0xff]
        %v1262 = vld [vmem:[%s7 + $0x1a0] sm:$0xff]
        %v1263 = vld [vmem:[%s7 + $0x1a8] sm:$0xff]
        %v1264 = vld [vmem:[%s7 + $0x1b0] sm:$0xff]
        %v1265 = vld [vmem:[%s7 + $0x1b8] sm:$0xff]
        %v1266 = vld [vmem:[%s7 + $0x1c0] sm:$0xff]
        %v1267 = vld [vmem:[%s7 + $0x1c8] sm:$0xff]
        %v1268 = vld [vmem:[%s7 + $0x1d0] sm:$0xff]
        %v1269 = vld [vmem:[%s7 + $0x1d8] sm:$0xff]
        %v1270 = vld [vmem:[%s7 + $0x1e0] sm:$0xff]
        %v1271 = vld [vmem:[%s7 + $0x1e8] sm:$0xff]
        %v1272 = vld [vmem:[%s7 + $0x1f0] sm:$0xff]
        %v1273 = vld [vmem:[%s7 + $0x1f8] sm:$0xff]
        %v1274 = vld [vmem:[%s8] sm:$0xf]
        %v1276 = vlaneseq
        %v1277 = vshrl.u32 %v1276, 7
        %v1278 = vsub.s32 0, %v1277
        %v1279 = vrot.slane %v1274, %v1278
        %v1280 = vlaneseq
        %v1281 = vshrl.u32 %v1280, 7
        %v1282 = vsub.s32 1, %v1281
        %v1283 = vrot.slane %v1274, %v1282
        %v1284 = vlaneseq
        %v1285 = vshrl.u32 %v1284, 7
        %v1286 = vsub.s32 2, %v1285
        %v1287 = vrot.slane %v1274, %v1286
        %v1288 = vlaneseq
        %v1289 = vshrl.u32 %v1288, 7
        %v1290 = vsub.s32 3, %v1289
        %v1291 = vrot.slane %v1274, %v1290
        %v1360 = vunpack.c.l.b16 %v1210
        %v1361 = vunpack.c.h.b16 %v1210
        %v1362 = vunpack.c.l.b16 %v1211
        %v1363 = vunpack.c.h.b16 %v1211
        %v1364 = vunpack.c.l.b16 %v1212
        %v1365 = vunpack.c.h.b16 %v1212
        %v1366 = vunpack.c.l.b16 %v1213
        %v1367 = vunpack.c.h.b16 %v1213
        %v1368 = vunpack.c.l.b16 %v1214
        %v1369 = vunpack.c.h.b16 %v1214
        %v1370 = vunpack.c.l.b16 %v1215
        %v1371 = vunpack.c.h.b16 %v1215
        %v1372 = vunpack.c.l.b16 %v1216
        %v1373 = vunpack.c.h.b16 %v1216
        %v1374 = vunpack.c.l.b16 %v1217
        %v1375 = vunpack.c.h.b16 %v1217
        %v1376 = vunpack.c.l.b16 %v1218
        %v1377 = vunpack.c.h.b16 %v1218
        %v1378 = vunpack.c.l.b16 %v1219
        %v1379 = vunpack.c.h.b16 %v1219
        %v1380 = vunpack.c.l.b16 %v1220
        %v1381 = vunpack.c.h.b16 %v1220
        %v1382 = vunpack.c.l.b16 %v1221
        %v1383 = vunpack.c.h.b16 %v1221
        %v1384 = vunpack.c.l.b16 %v1222
        %v1385 = vunpack.c.h.b16 %v1222
        %v1386 = vunpack.c.l.b16 %v1223
        %v1387 = vunpack.c.h.b16 %v1223
        %v1388 = vunpack.c.l.b16 %v1224
        %v1389 = vunpack.c.h.b16 %v1224
        %v1390 = vunpack.c.l.b16 %v1225
        %v1391 = vunpack.c.h.b16 %v1225
        %v1392 = vunpack.c.l.b16 %v1226
        %v1393 = vunpack.c.h.b16 %v1226
        %v1394 = vunpack.c.l.b16 %v1227
        %v1395 = vunpack.c.h.b16 %v1227
        %v1396 = vunpack.c.l.b16 %v1228
        %v1397 = vunpack.c.h.b16 %v1228
        %v1398 = vunpack.c.l.b16 %v1229
        %v1399 = vunpack.c.h.b16 %v1229
        %v1400 = vunpack.c.l.b16 %v1230
        %v1401 = vunpack.c.h.b16 %v1230
        %v1402 = vunpack.c.l.b16 %v1231
        %v1403 = vunpack.c.h.b16 %v1231
        %v1404 = vunpack.c.l.b16 %v1232
        %v1405 = vunpack.c.h.b16 %v1232
        %v1406 = vunpack.c.l.b16 %v1233
        %v1407 = vunpack.c.h.b16 %v1233
        %v1408 = vunpack.c.l.b16 %v1234
        %v1409 = vunpack.c.h.b16 %v1234
        %v1410 = vunpack.c.l.b16 %v1235
        %v1411 = vunpack.c.h.b16 %v1235
        %v1412 = vunpack.c.l.b16 %v1236
        %v1413 = vunpack.c.h.b16 %v1236
        %v1414 = vunpack.c.l.b16 %v1237
        %v1415 = vunpack.c.h.b16 %v1237
        %v1416 = vunpack.c.l.b16 %v1238
        %v1417 = vunpack.c.h.b16 %v1238
        %v1418 = vunpack.c.l.b16 %v1239
        %v1419 = vunpack.c.h.b16 %v1239
        %v1420 = vunpack.c.l.b16 %v1240
        %v1421 = vunpack.c.h.b16 %v1240
        %v1422 = vunpack.c.l.b16 %v1241
        %v1423 = vunpack.c.h.b16 %v1241
        %v1424 = vunpack.c.l.b16 %v1242
        %v1425 = vunpack.c.h.b16 %v1242
        %v1426 = vunpack.c.l.b16 %v1243
        %v1427 = vunpack.c.h.b16 %v1243
        %v1428 = vunpack.c.l.b16 %v1244
        %v1429 = vunpack.c.h.b16 %v1244
        %v1430 = vunpack.c.l.b16 %v1245
        %v1431 = vunpack.c.h.b16 %v1245
        %v1432 = vunpack.c.l.b16 %v1246
        %v1433 = vunpack.c.h.b16 %v1246
        %v1434 = vunpack.c.l.b16 %v1247
        %v1435 = vunpack.c.h.b16 %v1247
        %v1436 = vunpack.c.l.b16 %v1248
        %v1437 = vunpack.c.h.b16 %v1248
        %v1438 = vunpack.c.l.b16 %v1249
        %v1439 = vunpack.c.h.b16 %v1249
        %v1440 = vunpack.c.l.b16 %v1250
        %v1441 = vunpack.c.h.b16 %v1250
        %v1442 = vunpack.c.l.b16 %v1251
        %v1443 = vunpack.c.h.b16 %v1251
        %v1444 = vunpack.c.l.b16 %v1252
        %v1445 = vunpack.c.h.b16 %v1252
        %v1446 = vunpack.c.l.b16 %v1253
        %v1447 = vunpack.c.h.b16 %v1253
        %v1448 = vunpack.c.l.b16 %v1254
        %v1449 = vunpack.c.h.b16 %v1254
        %v1450 = vunpack.c.l.b16 %v1255
        %v1451 = vunpack.c.h.b16 %v1255
        %v1452 = vunpack.c.l.b16 %v1256
        %v1453 = vunpack.c.h.b16 %v1256
        %v1454 = vunpack.c.l.b16 %v1257
        %v1455 = vunpack.c.h.b16 %v1257
        %v1456 = vunpack.c.l.b16 %v1258
        %v1457 = vunpack.c.h.b16 %v1258
        %v1458 = vunpack.c.l.b16 %v1259
        %v1459 = vunpack.c.h.b16 %v1259
        %v1460 = vunpack.c.l.b16 %v1260
        %v1461 = vunpack.c.h.b16 %v1260
        %v1462 = vunpack.c.l.b16 %v1261
        %v1463 = vunpack.c.h.b16 %v1261
        %v1464 = vunpack.c.l.b16 %v1262
        %v1465 = vunpack.c.h.b16 %v1262
        %v1466 = vunpack.c.l.b16 %v1263
        %v1467 = vunpack.c.h.b16 %v1263
        %v1468 = vunpack.c.l.b16 %v1264
        %v1469 = vunpack.c.h.b16 %v1264
        %v1470 = vunpack.c.l.b16 %v1265
        %v1471 = vunpack.c.h.b16 %v1265
        %v1472 = vunpack.c.l.b16 %v1266
        %v1473 = vunpack.c.h.b16 %v1266
        %v1474 = vunpack.c.l.b16 %v1267
        %v1475 = vunpack.c.h.b16 %v1267
        %v1476 = vunpack.c.l.b16 %v1268
        %v1477 = vunpack.c.h.b16 %v1268
        %v1478 = vunpack.c.l.b16 %v1269
        %v1479 = vunpack.c.h.b16 %v1269
        %v1480 = vunpack.c.l.b16 %v1270
        %v1481 = vunpack.c.h.b16 %v1270
        %v1482 = vunpack.c.l.b16 %v1271
        %v1483 = vunpack.c.h.b16 %v1271
        %v1484 = vunpack.c.l.b16 %v1272
        %v1485 = vunpack.c.h.b16 %v1272
        %v1486 = vunpack.c.l.b16 %v1273
        %v1487 = vunpack.c.h.b16 %v1273
        %v1488 = vpack.c.b16 %v1364, %v1360
        %v1489 = vpack.c.b16 %v1365, %v1361
        %v1490 = vpack.c.b16 %v1366, %v1362
        %v1491 = vpack.c.b16 %v1367, %v1363
        %v1492 = vpack.c.b16 %v1372, %v1368
        %v1493 = vpack.c.b16 %v1373, %v1369
        %v1494 = vpack.c.b16 %v1374, %v1370
        %v1495 = vpack.c.b16 %v1375, %v1371
        %v1496 = vpack.c.b16 %v1380, %v1376
        %v1497 = vpack.c.b16 %v1381, %v1377
        %v1498 = vpack.c.b16 %v1382, %v1378
        %v1499 = vpack.c.b16 %v1383, %v1379
        %v1500 = vpack.c.b16 %v1388, %v1384
        %v1501 = vpack.c.b16 %v1389, %v1385
        %v1502 = vpack.c.b16 %v1390, %v1386
        %v1503 = vpack.c.b16 %v1391, %v1387
        %v1504 = vpack.c.b16 %v1396, %v1392
        %v1505 = vpack.c.b16 %v1397, %v1393
        %v1506 = vpack.c.b16 %v1398, %v1394
        %v1507 = vpack.c.b16 %v1399, %v1395
        %v1508 = vpack.c.b16 %v1404, %v1400
        %v1509 = vpack.c.b16 %v1405, %v1401
        %v1510 = vpack.c.b16 %v1406, %v1402
        %v1511 = vpack.c.b16 %v1407, %v1403
        %v1512 = vpack.c.b16 %v1412, %v1408
        %v1513 = vpack.c.b16 %v1413, %v1409
        %v1514 = vpack.c.b16 %v1414, %v1410
        %v1515 = vpack.c.b16 %v1415, %v1411
        %v1516 = vpack.c.b16 %v1420, %v1416
        %v1517 = vpack.c.b16 %v1421, %v1417
        %v1518 = vpack.c.b16 %v1422, %v1418
        %v1519 = vpack.c.b16 %v1423, %v1419
        %v1520 = vpack.c.b16 %v1428, %v1424
        %v1521 = vpack.c.b16 %v1429, %v1425
        %v1522 = vpack.c.b16 %v1430, %v1426
        %v1523 = vpack.c.b16 %v1431, %v1427
        %v1524 = vpack.c.b16 %v1436, %v1432
        %v1525 = vpack.c.b16 %v1437, %v1433
        %v1526 = vpack.c.b16 %v1438, %v1434
        %v1527 = vpack.c.b16 %v1439, %v1435
        %v1528 = vpack.c.b16 %v1444, %v1440
        %v1529 = vpack.c.b16 %v1445, %v1441
        %v1530 = vpack.c.b16 %v1446, %v1442
        %v1531 = vpack.c.b16 %v1447, %v1443
        %v1532 = vpack.c.b16 %v1452, %v1448
        %v1533 = vpack.c.b16 %v1453, %v1449
        %v1534 = vpack.c.b16 %v1454, %v1450
        %v1535 = vpack.c.b16 %v1455, %v1451
        %v1536 = vpack.c.b16 %v1460, %v1456
        %v1537 = vpack.c.b16 %v1461, %v1457
        %v1538 = vpack.c.b16 %v1462, %v1458
        %v1539 = vpack.c.b16 %v1463, %v1459
        %v1540 = vpack.c.b16 %v1468, %v1464
        %v1541 = vpack.c.b16 %v1469, %v1465
        %v1542 = vpack.c.b16 %v1470, %v1466
        %v1543 = vpack.c.b16 %v1471, %v1467
        %v1544 = vpack.c.b16 %v1476, %v1472
        %v1545 = vpack.c.b16 %v1477, %v1473
        %v1546 = vpack.c.b16 %v1478, %v1474
        %v1547 = vpack.c.b16 %v1479, %v1475
        %v1548 = vpack.c.b16 %v1484, %v1480
        %v1549 = vpack.c.b16 %v1485, %v1481
        %v1550 = vpack.c.b16 %v1486, %v1482
        %v1551 = vpack.c.b16 %v1487, %v1483
        %1616 = vmatprep.subr.bf16.mxu0 %v1517
        %1617 = vmatpush1.bf16.msra.mxu0 %v1516
        %1618 = vmatprep.subr.bf16.mxu0 %v1513
        %1619 = vmatpush1.bf16.msra.mxu0 %v1512
        %1620 = vmatprep.subr.bf16.mxu0 %v1509
        %1621 = vmatpush1.bf16.msra.mxu0 %v1508
        %1622 = vmatprep.subr.bf16.mxu0 %v1505
        %1623 = vmatpush1.bf16.msra.mxu0 %v1504
        %1624 = vmatprep.subr.bf16.mxu0 %v1501
        %1625 = vmatpush1.bf16.msra.mxu0 %v1500
        %1626 = vmatprep.subr.bf16.mxu0 %v1497
        %1627 = vmatpush1.bf16.msra.mxu0 %v1496
        %1628 = vmatprep.subr.bf16.mxu0 %v1493
        %1629 = vmatpush1.bf16.msra.mxu0 %v1492
        %1630 = vmatprep.subr.bf16.mxu0 %v1489
        %1631 = vmatpush1.bf16.msra.mxu0 %v1488
        %1632 = vmatprep.subr.bf16.mxu0 %v1549
        %1633 = vmatpush2.bf16.msra.mxu0 %v1548
        %1634 = vmatprep.subr.bf16.mxu0 %v1545
        %1635 = vmatpush2.bf16.msra.mxu0 %v1544
        %1636 = vmatprep.subr.bf16.mxu0 %v1541
        %1637 = vmatpush2.bf16.msra.mxu0 %v1540
        %1638 = vmatprep.subr.bf16.mxu0 %v1537
        %1639 = vmatpush2.bf16.msra.mxu0 %v1536
        %1640 = vmatprep.subr.bf16.mxu0 %v1533
        %1641 = vmatpush2.bf16.msra.mxu0 %v1532
        %1642 = vmatprep.subr.bf16.mxu0 %v1529
        %1643 = vmatpush2.bf16.msra.mxu0 %v1528
        %1644 = vmatprep.subr.bf16.mxu0 %v1525
        %1645 = vmatpush2.bf16.msra.mxu0 %v1524
        %1646 = vmatprep.subr.bf16.mxu0 %v1521
        %1647 = vmatpush2.bf16.msra.mxu0 %v1520
        %1648 = vmatprep.mubr.bf16.mxu0 %v1179
        %1649 = vmatmul.mubr.bf16.gmra.mxu0 %v1178
        %v1650 = vpop.f32.mrf.mxu0
        %v1651 = vadd.f32 %v1279, %v1650
        %v1652 = vpop.f32.mrf.mxu0
        %v1653 = vadd.f32 %v1283, %v1652
        %v1654 = vpop.f32.mrf.mxu0
        %v1655 = vadd.f32 %v1279, %v1654
        %v1656 = vpop.f32.mrf.mxu0
        %v1657 = vadd.f32 %v1283, %v1656
        %1658 = vmatprep.mubr.bf16.mxu0 %v1181
        %1659 = vmatmul.mubr.bf16.gmra.mxu0 %v1180
        %v1660 = vpop.f32.mrf.mxu0
        %v1661 = vadd.f32 %v1279, %v1660
        %v1662 = vpop.f32.mrf.mxu0
        %v1663 = vadd.f32 %v1283, %v1662
        %v1664 = vpop.f32.mrf.mxu0
        %v1665 = vadd.f32 %v1279, %v1664
        %v1666 = vpop.f32.mrf.mxu0
        %v1667 = vadd.f32 %v1283, %v1666
        %1668 = vmatprep.mubr.bf16.mxu0 %v1183
        %1669 = vmatmul.mubr.bf16.gmra.mxu0 %v1182
        %v1670 = vpop.f32.mrf.mxu0
        %v1671 = vadd.f32 %v1279, %v1670
        %v1672 = vpop.f32.mrf.mxu0
        %v1673 = vadd.f32 %v1283, %v1672
        %v1674 = vpop.f32.mrf.mxu0
        %v1675 = vadd.f32 %v1279, %v1674
        %v1676 = vpop.f32.mrf.mxu0
        %v1677 = vadd.f32 %v1283, %v1676
        %1678 = vmatprep.mubr.bf16.mxu0 %v1185
        %1679 = vmatmul.mubr.bf16.gmra.mxu0 %v1184
        %v1680 = vpop.f32.mrf.mxu0
        %v1681 = vadd.f32 %v1279, %v1680
        %v1682 = vpop.f32.mrf.mxu0
        %v1683 = vadd.f32 %v1283, %v1682
        %v1684 = vpop.f32.mrf.mxu0
        %v1685 = vadd.f32 %v1279, %v1684
        %v1686 = vpop.f32.mrf.mxu0
        %v1687 = vadd.f32 %v1283, %v1686
        %1688 = vmatprep.mubr.bf16.mxu0 %v1187
        %1689 = vmatmul.mubr.bf16.gmra.mxu0 %v1186
        %v1690 = vpop.f32.mrf.mxu0
        %v1691 = vadd.f32 %v1279, %v1690
        %v1692 = vpop.f32.mrf.mxu0
        %v1693 = vadd.f32 %v1283, %v1692
        %v1694 = vpop.f32.mrf.mxu0
        %v1695 = vadd.f32 %v1279, %v1694
        %v1696 = vpop.f32.mrf.mxu0
        %v1697 = vadd.f32 %v1283, %v1696
        %1698 = vmatprep.mubr.bf16.mxu0 %v1189
        %1699 = vmatmul.mubr.bf16.gmra.mxu0 %v1188
        %v1700 = vpop.f32.mrf.mxu0
        %v1701 = vadd.f32 %v1279, %v1700
        %v1702 = vpop.f32.mrf.mxu0
        %v1703 = vadd.f32 %v1283, %v1702
        %v1704 = vpop.f32.mrf.mxu0
        %v1705 = vadd.f32 %v1279, %v1704
        %v1706 = vpop.f32.mrf.mxu0
        %v1707 = vadd.f32 %v1283, %v1706
        %1708 = vmatprep.mubr.bf16.mxu0 %v1191
        %1709 = vmatmul.mubr.bf16.gmra.mxu0 %v1190
        %v1710 = vpop.f32.mrf.mxu0
        %v1711 = vadd.f32 %v1279, %v1710
        %v1712 = vpop.f32.mrf.mxu0
        %v1713 = vadd.f32 %v1283, %v1712
        %v1714 = vpop.f32.mrf.mxu0
        %v1715 = vadd.f32 %v1279, %v1714
        %v1716 = vpop.f32.mrf.mxu0
        %v1717 = vadd.f32 %v1283, %v1716
        %1718 = vmatprep.mubr.bf16.mxu0 %v1193
        %1719 = vmatmul.mubr.bf16.gmra.mxu0 %v1192
        %v1720 = vpop.f32.mrf.mxu0
        %v1721 = vadd.f32 %v1279, %v1720
        %v1722 = vpop.f32.mrf.mxu0
        %v1723 = vadd.f32 %v1283, %v1722
        %v1724 = vpop.f32.mrf.mxu0
        %v1725 = vadd.f32 %v1279, %v1724
        %v1726 = vpop.f32.mrf.mxu0
        %v1727 = vadd.f32 %v1283, %v1726
        %1728 = vmatprep.mubr.bf16.mxu0 %v1195
        %1729 = vmatmul.mubr.bf16.gmra.mxu0 %v1194
        %v1730 = vpop.f32.mrf.mxu0
        %v1731 = vadd.f32 %v1279, %v1730
        %v1732 = vpop.f32.mrf.mxu0
        %v1733 = vadd.f32 %v1283, %v1732
        %v1734 = vpop.f32.mrf.mxu0
        %v1735 = vadd.f32 %v1279, %v1734
        %v1736 = vpop.f32.mrf.mxu0
        %v1737 = vadd.f32 %v1283, %v1736
        %1738 = vmatprep.mubr.bf16.mxu0 %v1197
        %1739 = vmatmul.mubr.bf16.gmra.mxu0 %v1196
        %v1740 = vpop.f32.mrf.mxu0
        %v1741 = vadd.f32 %v1279, %v1740
        %v1742 = vpop.f32.mrf.mxu0
        %v1743 = vadd.f32 %v1283, %v1742
        %v1744 = vpop.f32.mrf.mxu0
        %v1745 = vadd.f32 %v1279, %v1744
        %v1746 = vpop.f32.mrf.mxu0
        %v1747 = vadd.f32 %v1283, %v1746
        %1748 = vmatprep.mubr.bf16.mxu0 %v1199
        %1749 = vmatmul.mubr.bf16.gmra.mxu0 %v1198
        %v1750 = vpop.f32.mrf.mxu0
        %v1751 = vadd.f32 %v1279, %v1750
        %v1752 = vpop.f32.mrf.mxu0
        %v1753 = vadd.f32 %v1283, %v1752
        %v1754 = vpop.f32.mrf.mxu0
        %v1755 = vadd.f32 %v1279, %v1754
        %v1756 = vpop.f32.mrf.mxu0
        %v1757 = vadd.f32 %v1283, %v1756
        %1758 = vmatprep.mubr.bf16.mxu0 %v1201
        %1759 = vmatmul.mubr.bf16.gmra.mxu0 %v1200
        %v1760 = vpop.f32.mrf.mxu0
        %v1761 = vadd.f32 %v1279, %v1760
        %v1762 = vpop.f32.mrf.mxu0
        %v1763 = vadd.f32 %v1283, %v1762
        %v1764 = vpop.f32.mrf.mxu0
        %v1765 = vadd.f32 %v1279, %v1764
        %v1766 = vpop.f32.mrf.mxu0
        %v1767 = vadd.f32 %v1283, %v1766
        %1768 = vmatprep.mubr.bf16.mxu0 %v1203
        %1769 = vmatmul.mubr.bf16.gmra.mxu0 %v1202
        %v1770 = vpop.f32.mrf.mxu0
        %v1771 = vadd.f32 %v1279, %v1770
        %v1772 = vpop.f32.mrf.mxu0
        %v1773 = vadd.f32 %v1283, %v1772
        %v1774 = vpop.f32.mrf.mxu0
        %v1775 = vadd.f32 %v1279, %v1774
        %v1776 = vpop.f32.mrf.mxu0
        %v1777 = vadd.f32 %v1283, %v1776
        %1778 = vmatprep.mubr.bf16.mxu0 %v1205
        %1779 = vmatmul.mubr.bf16.gmra.mxu0 %v1204
        %v1780 = vpop.f32.mrf.mxu0
        %v1781 = vadd.f32 %v1279, %v1780
        %v1782 = vpop.f32.mrf.mxu0
        %v1783 = vadd.f32 %v1283, %v1782
        %v1784 = vpop.f32.mrf.mxu0
        %v1785 = vadd.f32 %v1279, %v1784
        %v1786 = vpop.f32.mrf.mxu0
        %v1787 = vadd.f32 %v1283, %v1786
        %1788 = vmatprep.mubr.bf16.mxu0 %v1207
        %1789 = vmatmul.mubr.bf16.gmra.mxu0 %v1206
        %v1790 = vpop.f32.mrf.mxu0
        %v1791 = vadd.f32 %v1279, %v1790
        %v1792 = vpop.f32.mrf.mxu0
        %v1793 = vadd.f32 %v1283, %v1792
        %v1794 = vpop.f32.mrf.mxu0
        %v1795 = vadd.f32 %v1279, %v1794
        %v1796 = vpop.f32.mrf.mxu0
        %v1797 = vadd.f32 %v1283, %v1796
        %1798 = vmatprep.mubr.bf16.mxu0 %v1209
        %1799 = vmatmul.mubr.bf16.gmra.mxu0 %v1208
        %v1800 = vpop.f32.mrf.mxu0
        %v1801 = vadd.f32 %v1279, %v1800
        %v1802 = vpop.f32.mrf.mxu0
        %v1803 = vadd.f32 %v1283, %v1802
        %v1804 = vpop.f32.mrf.mxu0
        %v1805 = vadd.f32 %v1279, %v1804
        %v1806 = vpop.f32.mrf.mxu0
        %v1807 = vadd.f32 %v1283, %v1806
        %1808 = vdwg.mxu0
        %1809 = vmatprep.subr.bf16.mxu0 %v1519
        %1810 = vmatpush1.bf16.msra.mxu0 %v1518
        %1811 = vmatprep.subr.bf16.mxu0 %v1515
        %1812 = vmatpush1.bf16.msra.mxu0 %v1514
        %1813 = vmatprep.subr.bf16.mxu0 %v1511
        %1814 = vmatpush1.bf16.msra.mxu0 %v1510
        %1815 = vmatprep.subr.bf16.mxu0 %v1507
        %1816 = vmatpush1.bf16.msra.mxu0 %v1506
        %1817 = vmatprep.subr.bf16.mxu0 %v1503
        %1818 = vmatpush1.bf16.msra.mxu0 %v1502
        %1819 = vmatprep.subr.bf16.mxu0 %v1499
        %1820 = vmatpush1.bf16.msra.mxu0 %v1498
        %1821 = vmatprep.subr.bf16.mxu0 %v1495
        %1822 = vmatpush1.bf16.msra.mxu0 %v1494
        %1823 = vmatprep.subr.bf16.mxu0 %v1491
        %1824 = vmatpush1.bf16.msra.mxu0 %v1490
        %1825 = vmatprep.subr.bf16.mxu0 %v1551
        %1826 = vmatpush2.bf16.msra.mxu0 %v1550
        %1827 = vmatprep.subr.bf16.mxu0 %v1547
        %1828 = vmatpush2.bf16.msra.mxu0 %v1546
        %1829 = vmatprep.subr.bf16.mxu0 %v1543
        %1830 = vmatpush2.bf16.msra.mxu0 %v1542
        %1831 = vmatprep.subr.bf16.mxu0 %v1539
        %1832 = vmatpush2.bf16.msra.mxu0 %v1538
        %1833 = vmatprep.subr.bf16.mxu0 %v1535
        %1834 = vmatpush2.bf16.msra.mxu0 %v1534
        %1835 = vmatprep.subr.bf16.mxu0 %v1531
        %1836 = vmatpush2.bf16.msra.mxu0 %v1530
        %1837 = vmatprep.subr.bf16.mxu0 %v1527
        %1838 = vmatpush2.bf16.msra.mxu0 %v1526
        %1839 = vmatprep.subr.bf16.mxu0 %v1523
        %1840 = vmatpush2.bf16.msra.mxu0 %v1522
        %1841 = vmatprep.mubr.bf16.mxu0 %v1179
        %1842 = vmatmul.mubr.bf16.gmra.mxu0 %v1178
        %v1843 = vpop.f32.mrf.mxu0
        %v1844 = vadd.f32 %v1287, %v1843
        %v1845 = vpop.f32.mrf.mxu0
        %v1846 = vadd.f32 %v1291, %v1845
        %v1847 = vpop.f32.mrf.mxu0
        %v1848 = vadd.f32 %v1287, %v1847
        %v1849 = vpop.f32.mrf.mxu0
        %v1850 = vadd.f32 %v1291, %v1849
        %1851 = vmatprep.mubr.bf16.mxu0 %v1181
        %1852 = vmatmul.mubr.bf16.gmra.mxu0 %v1180
        %v1853 = vpop.f32.mrf.mxu0
        %v1854 = vadd.f32 %v1287, %v1853
        %v1855 = vpop.f32.mrf.mxu0
        %v1856 = vadd.f32 %v1291, %v1855
        %v1857 = vpop.f32.mrf.mxu0
        %v1858 = vadd.f32 %v1287, %v1857
        %v1859 = vpop.f32.mrf.mxu0
        %v1860 = vadd.f32 %v1291, %v1859
        %1861 = vmatprep.mubr.bf16.mxu0 %v1183
        %1862 = vmatmul.mubr.bf16.gmra.mxu0 %v1182
        %v1863 = vpop.f32.mrf.mxu0
        %v1864 = vadd.f32 %v1287, %v1863
        %v1865 = vpop.f32.mrf.mxu0
        %v1866 = vadd.f32 %v1291, %v1865
        %v1867 = vpop.f32.mrf.mxu0
        %v1868 = vadd.f32 %v1287, %v1867
        %v1869 = vpop.f32.mrf.mxu0
        %v1870 = vadd.f32 %v1291, %v1869
        %1871 = vmatprep.mubr.bf16.mxu0 %v1185
        %1872 = vmatmul.mubr.bf16.gmra.mxu0 %v1184
        %v1873 = vpop.f32.mrf.mxu0
        %v1874 = vadd.f32 %v1287, %v1873
        %v1875 = vpop.f32.mrf.mxu0
        %v1876 = vadd.f32 %v1291, %v1875
        %v1877 = vpop.f32.mrf.mxu0
        %v1878 = vadd.f32 %v1287, %v1877
        %v1879 = vpop.f32.mrf.mxu0
        %v1880 = vadd.f32 %v1291, %v1879
        %1881 = vmatprep.mubr.bf16.mxu0 %v1187
        %1882 = vmatmul.mubr.bf16.gmra.mxu0 %v1186
        %v1883 = vpop.f32.mrf.mxu0
        %v1884 = vadd.f32 %v1287, %v1883
        %v1885 = vpop.f32.mrf.mxu0
        %v1886 = vadd.f32 %v1291, %v1885
        %v1887 = vpop.f32.mrf.mxu0
        %v1888 = vadd.f32 %v1287, %v1887
        %v1889 = vpop.f32.mrf.mxu0
        %v1890 = vadd.f32 %v1291, %v1889
        %1891 = vmatprep.mubr.bf16.mxu0 %v1189
        %1892 = vmatmul.mubr.bf16.gmra.mxu0 %v1188
        %v1893 = vpop.f32.mrf.mxu0
        %v1894 = vadd.f32 %v1287, %v1893
        %v1895 = vpop.f32.mrf.mxu0
        %v1896 = vadd.f32 %v1291, %v1895
        %v1897 = vpop.f32.mrf.mxu0
        %v1898 = vadd.f32 %v1287, %v1897
        %v1899 = vpop.f32.mrf.mxu0
        %v1900 = vadd.f32 %v1291, %v1899
        %1901 = vmatprep.mubr.bf16.mxu0 %v1191
        %1902 = vmatmul.mubr.bf16.gmra.mxu0 %v1190
        %v1903 = vpop.f32.mrf.mxu0
        %v1904 = vadd.f32 %v1287, %v1903
        %v1905 = vpop.f32.mrf.mxu0
        %v1906 = vadd.f32 %v1291, %v1905
        %v1907 = vpop.f32.mrf.mxu0
        %v1908 = vadd.f32 %v1287, %v1907
        %v1909 = vpop.f32.mrf.mxu0
        %v1910 = vadd.f32 %v1291, %v1909
        %1911 = vmatprep.mubr.bf16.mxu0 %v1193
        %1912 = vmatmul.mubr.bf16.gmra.mxu0 %v1192
        %v1913 = vpop.f32.mrf.mxu0
        %v1914 = vadd.f32 %v1287, %v1913
        %v1915 = vpop.f32.mrf.mxu0
        %v1916 = vadd.f32 %v1291, %v1915
        %v1917 = vpop.f32.mrf.mxu0
        %v1918 = vadd.f32 %v1287, %v1917
        %v1919 = vpop.f32.mrf.mxu0
        %v1920 = vadd.f32 %v1291, %v1919
        %1921 = vmatprep.mubr.bf16.mxu0 %v1195
        %1922 = vmatmul.mubr.bf16.gmra.mxu0 %v1194
        %v1923 = vpop.f32.mrf.mxu0
        %v1924 = vadd.f32 %v1287, %v1923
        %v1925 = vpop.f32.mrf.mxu0
        %v1926 = vadd.f32 %v1291, %v1925
        %v1927 = vpop.f32.mrf.mxu0
        %v1928 = vadd.f32 %v1287, %v1927
        %v1929 = vpop.f32.mrf.mxu0
        %v1930 = vadd.f32 %v1291, %v1929
        %1931 = vmatprep.mubr.bf16.mxu0 %v1197
        %1932 = vmatmul.mubr.bf16.gmra.mxu0 %v1196
        %v1933 = vpop.f32.mrf.mxu0
        %v1934 = vadd.f32 %v1287, %v1933
        %v1935 = vpop.f32.mrf.mxu0
        %v1936 = vadd.f32 %v1291, %v1935
        %v1937 = vpop.f32.mrf.mxu0
        %v1938 = vadd.f32 %v1287, %v1937
        %v1939 = vpop.f32.mrf.mxu0
        %v1940 = vadd.f32 %v1291, %v1939
        %1941 = vmatprep.mubr.bf16.mxu0 %v1199
        %1942 = vmatmul.mubr.bf16.gmra.mxu0 %v1198
        %v1943 = vpop.f32.mrf.mxu0
        %v1944 = vadd.f32 %v1287, %v1943
        %v1945 = vpop.f32.mrf.mxu0
        %v1946 = vadd.f32 %v1291, %v1945
        %v1947 = vpop.f32.mrf.mxu0
        %v1948 = vadd.f32 %v1287, %v1947
        %v1949 = vpop.f32.mrf.mxu0
        %v1950 = vadd.f32 %v1291, %v1949
        %1951 = vmatprep.mubr.bf16.mxu0 %v1201
        %1952 = vmatmul.mubr.bf16.gmra.mxu0 %v1200
        %v1953 = vpop.f32.mrf.mxu0
        %v1954 = vadd.f32 %v1287, %v1953
        %v1955 = vpop.f32.mrf.mxu0
        %v1956 = vadd.f32 %v1291, %v1955
        %v1957 = vpop.f32.mrf.mxu0
        %v1958 = vadd.f32 %v1287, %v1957
        %v1959 = vpop.f32.mrf.mxu0
        %v1960 = vadd.f32 %v1291, %v1959
        %1961 = vmatprep.mubr.bf16.mxu0 %v1203
        %1962 = vmatmul.mubr.bf16.gmra.mxu0 %v1202
        %v1963 = vpop.f32.mrf.mxu0
        %v1964 = vadd.f32 %v1287, %v1963
        %v1965 = vpop.f32.mrf.mxu0
        %v1966 = vadd.f32 %v1291, %v1965
        %v1967 = vpop.f32.mrf.mxu0
        %v1968 = vadd.f32 %v1287, %v1967
        %v1969 = vpop.f32.mrf.mxu0
        %v1970 = vadd.f32 %v1291, %v1969
        %1971 = vmatprep.mubr.bf16.mxu0 %v1205
        %1972 = vmatmul.mubr.bf16.gmra.mxu0 %v1204
        %v1973 = vpop.f32.mrf.mxu0
        %v1974 = vadd.f32 %v1287, %v1973
        %v1975 = vpop.f32.mrf.mxu0
        %v1976 = vadd.f32 %v1291, %v1975
        %v1977 = vpop.f32.mrf.mxu0
        %v1978 = vadd.f32 %v1287, %v1977
        %v1979 = vpop.f32.mrf.mxu0
        %v1980 = vadd.f32 %v1291, %v1979
        %1981 = vmatprep.mubr.bf16.mxu0 %v1207
        %1982 = vmatmul.mubr.bf16.gmra.mxu0 %v1206
        %v1983 = vpop.f32.mrf.mxu0
        %v1984 = vadd.f32 %v1287, %v1983
        %v1985 = vpop.f32.mrf.mxu0
        %v1986 = vadd.f32 %v1291, %v1985
        %v1987 = vpop.f32.mrf.mxu0
        %v1988 = vadd.f32 %v1287, %v1987
        %v1989 = vpop.f32.mrf.mxu0
        %v1990 = vadd.f32 %v1291, %v1989
        %1991 = vmatprep.mubr.bf16.mxu0 %v1209
        %1992 = vmatmul.mubr.bf16.gmra.mxu0 %v1208
        %v1993 = vpop.f32.mrf.mxu0
        %v1994 = vadd.f32 %v1287, %v1993
        %v1995 = vpop.f32.mrf.mxu0
        %v1996 = vadd.f32 %v1291, %v1995
        %v1997 = vpop.f32.mrf.mxu0
        %v1998 = vadd.f32 %v1287, %v1997
        %v1999 = vpop.f32.mrf.mxu0
        %v2000 = vadd.f32 %v1291, %v1999
        %2001 = vdwg.mxu0
        %v2002 = vmax.f32 %v1651, 0.0
        %v2003 = vmax.f32 %v1653, 0.0
        %v2004 = vmax.f32 %v1844, 0.0
        %v2005 = vmax.f32 %v1846, 0.0
        %v2006 = vmax.f32 %v1655, 0.0
        %v2007 = vmax.f32 %v1657, 0.0
        %v2008 = vmax.f32 %v1848, 0.0
        %v2009 = vmax.f32 %v1850, 0.0
        %v2010 = vmax.f32 %v1661, 0.0
        %v2011 = vmax.f32 %v1663, 0.0
        %v2012 = vmax.f32 %v1854, 0.0
        %v2013 = vmax.f32 %v1856, 0.0
        %v2014 = vmax.f32 %v1665, 0.0
        %v2015 = vmax.f32 %v1667, 0.0
        %v2016 = vmax.f32 %v1858, 0.0
        %v2017 = vmax.f32 %v1860, 0.0
        %v2018 = vmax.f32 %v1671, 0.0
        %v2019 = vmax.f32 %v1673, 0.0
        %v2020 = vmax.f32 %v1864, 0.0
        %v2021 = vmax.f32 %v1866, 0.0
        %v2022 = vmax.f32 %v1675, 0.0
        %v2023 = vmax.f32 %v1677, 0.0
        %v2024 = vmax.f32 %v1868, 0.0
        %v2025 = vmax.f32 %v1870, 0.0
        %v2026 = vmax.f32 %v1681, 0.0
        %v2027 = vmax.f32 %v1683, 0.0
        %v2028 = vmax.f32 %v1874, 0.0
        %v2029 = vmax.f32 %v1876, 0.0
        %v2030 = vmax.f32 %v1685, 0.0
        %v2031 = vmax.f32 %v1687, 0.0
        %v2032 = vmax.f32 %v1878, 0.0
        %v2033 = vmax.f32 %v1880, 0.0
        %v2034 = vmax.f32 %v1691, 0.0
        %v2035 = vmax.f32 %v1693, 0.0
        %v2036 = vmax.f32 %v1884, 0.0
        %v2037 = vmax.f32 %v1886, 0.0
        %v2038 = vmax.f32 %v1695, 0.0
        %v2039 = vmax.f32 %v1697, 0.0
        %v2040 = vmax.f32 %v1888, 0.0
        %v2041 = vmax.f32 %v1890, 0.0
        %v2042 = vmax.f32 %v1701, 0.0
        %v2043 = vmax.f32 %v1703, 0.0
        %v2044 = vmax.f32 %v1894, 0.0
        %v2045 = vmax.f32 %v1896, 0.0
        %v2046 = vmax.f32 %v1705, 0.0
        %v2047 = vmax.f32 %v1707, 0.0
        %v2048 = vmax.f32 %v1898, 0.0
        %v2049 = vmax.f32 %v1900, 0.0
        %v2050 = vmax.f32 %v1711, 0.0
        %v2051 = vmax.f32 %v1713, 0.0
        %v2052 = vmax.f32 %v1904, 0.0
        %v2053 = vmax.f32 %v1906, 0.0
        %v2054 = vmax.f32 %v1715, 0.0
        %v2055 = vmax.f32 %v1717, 0.0
        %v2056 = vmax.f32 %v1908, 0.0
        %v2057 = vmax.f32 %v1910, 0.0
        %v2058 = vmax.f32 %v1721, 0.0
        %v2059 = vmax.f32 %v1723, 0.0
        %v2060 = vmax.f32 %v1914, 0.0
        %v2061 = vmax.f32 %v1916, 0.0
        %v2062 = vmax.f32 %v1725, 0.0
        %v2063 = vmax.f32 %v1727, 0.0
        %v2064 = vmax.f32 %v1918, 0.0
        %v2065 = vmax.f32 %v1920, 0.0
        %v2066 = vmax.f32 %v1731, 0.0
        %v2067 = vmax.f32 %v1733, 0.0
        %v2068 = vmax.f32 %v1924, 0.0
        %v2069 = vmax.f32 %v1926, 0.0
        %v2070 = vmax.f32 %v1735, 0.0
        %v2071 = vmax.f32 %v1737, 0.0
        %v2072 = vmax.f32 %v1928, 0.0
        %v2073 = vmax.f32 %v1930, 0.0
        %v2074 = vmax.f32 %v1741, 0.0
        %v2075 = vmax.f32 %v1743, 0.0
        %v2076 = vmax.f32 %v1934, 0.0
        %v2077 = vmax.f32 %v1936, 0.0
        %v2078 = vmax.f32 %v1745, 0.0
        %v2079 = vmax.f32 %v1747, 0.0
        %v2080 = vmax.f32 %v1938, 0.0
        %v2081 = vmax.f32 %v1940, 0.0
        %v2082 = vmax.f32 %v1751, 0.0
        %v2083 = vmax.f32 %v1753, 0.0
        %v2084 = vmax.f32 %v1944, 0.0
        %v2085 = vmax.f32 %v1946, 0.0
        %v2086 = vmax.f32 %v1755, 0.0
        %v2087 = vmax.f32 %v1757, 0.0
        %v2088 = vmax.f32 %v1948, 0.0
        %v2089 = vmax.f32 %v1950, 0.0
        %v2090 = vmax.f32 %v1761, 0.0
        %v2091 = vmax.f32 %v1763, 0.0
        %v2092 = vmax.f32 %v1954, 0.0
        %v2093 = vmax.f32 %v1956, 0.0
        %v2094 = vmax.f32 %v1765, 0.0
        %v2095 = vmax.f32 %v1767, 0.0
        %v2096 = vmax.f32 %v1958, 0.0
        %v2097 = vmax.f32 %v1960, 0.0
        %v2098 = vmax.f32 %v1771, 0.0
        %v2099 = vmax.f32 %v1773, 0.0
        %v2100 = vmax.f32 %v1964, 0.0
        %v2101 = vmax.f32 %v1966, 0.0
        %v2102 = vmax.f32 %v1775, 0.0
        %v2103 = vmax.f32 %v1777, 0.0
        %v2104 = vmax.f32 %v1968, 0.0
        %v2105 = vmax.f32 %v1970, 0.0
        %v2106 = vmax.f32 %v1781, 0.0
        %v2107 = vmax.f32 %v1783, 0.0
        %v2108 = vmax.f32 %v1974, 0.0
        %v2109 = vmax.f32 %v1976, 0.0
        %v2110 = vmax.f32 %v1785, 0.0
        %v2111 = vmax.f32 %v1787, 0.0
        %v2112 = vmax.f32 %v1978, 0.0
        %v2113 = vmax.f32 %v1980, 0.0
        %v2114 = vmax.f32 %v1791, 0.0
        %v2115 = vmax.f32 %v1793, 0.0
        %v2116 = vmax.f32 %v1984, 0.0
        %v2117 = vmax.f32 %v1986, 0.0
        %v2118 = vmax.f32 %v1795, 0.0
        %v2119 = vmax.f32 %v1797, 0.0
        %v2120 = vmax.f32 %v1988, 0.0
        %v2121 = vmax.f32 %v1990, 0.0
        %v2122 = vmax.f32 %v1801, 0.0
        %v2123 = vmax.f32 %v1803, 0.0
        %v2124 = vmax.f32 %v1994, 0.0
        %v2125 = vmax.f32 %v1996, 0.0
        %v2126 = vmax.f32 %v1805, 0.0
        %v2127 = vmax.f32 %v1807, 0.0
        %v2128 = vmax.f32 %v1998, 0.0
        %v2129 = vmax.f32 %v2000, 0.0
        %v2130 = vld [vmem:[%s9] sm:$0xf]
        %v2132 = vlaneseq
        %v2133 = vshrl.u32 %v2132, 7
        %v2134 = vsub.s32 0, %v2133
        %v2135 = vrot.slane %v2130, %v2134
        %v2136 = vlaneseq
        %v2137 = vshrl.u32 %v2136, 7
        %v2138 = vsub.s32 1, %v2137
        %v2139 = vrot.slane %v2130, %v2138
        %v2140 = vlaneseq
        %v2141 = vshrl.u32 %v2140, 7
        %v2142 = vsub.s32 2, %v2141
        %v2143 = vrot.slane %v2130, %v2142
        %v2144 = vlaneseq
        %v2145 = vshrl.u32 %v2144, 7
        %v2146 = vsub.s32 3, %v2145
        %v2147 = vrot.slane %v2130, %v2146
        %v2152 = vadd.f32 %v2002, %v2135
        %v2153 = vadd.f32 %v2003, %v2139
        %v2154 = vadd.f32 %v2004, %v2143
        %v2155 = vadd.f32 %v2005, %v2147
        %v2156 = vadd.f32 %v2006, %v2135
        %v2157 = vadd.f32 %v2007, %v2139
        %v2158 = vadd.f32 %v2008, %v2143
        %v2159 = vadd.f32 %v2009, %v2147
        %v2160 = vadd.f32 %v2010, %v2135
        %v2161 = vadd.f32 %v2011, %v2139
        %v2162 = vadd.f32 %v2012, %v2143
        %v2163 = vadd.f32 %v2013, %v2147
        %v2164 = vadd.f32 %v2014, %v2135
        %v2165 = vadd.f32 %v2015, %v2139
        %v2166 = vadd.f32 %v2016, %v2143
        %v2167 = vadd.f32 %v2017, %v2147
        %v2168 = vadd.f32 %v2018, %v2135
        %v2169 = vadd.f32 %v2019, %v2139
        %v2170 = vadd.f32 %v2020, %v2143
        %v2171 = vadd.f32 %v2021, %v2147
        %v2172 = vadd.f32 %v2022, %v2135
        %v2173 = vadd.f32 %v2023, %v2139
        %v2174 = vadd.f32 %v2024, %v2143
        %v2175 = vadd.f32 %v2025, %v2147
        %v2176 = vadd.f32 %v2026, %v2135
        %v2177 = vadd.f32 %v2027, %v2139
        %v2178 = vadd.f32 %v2028, %v2143
        %v2179 = vadd.f32 %v2029, %v2147
        %v2180 = vadd.f32 %v2030, %v2135
        %v2181 = vadd.f32 %v2031, %v2139
        %v2182 = vadd.f32 %v2032, %v2143
        %v2183 = vadd.f32 %v2033, %v2147
        %v2184 = vadd.f32 %v2034, %v2135
        %v2185 = vadd.f32 %v2035, %v2139
        %v2186 = vadd.f32 %v2036, %v2143
        %v2187 = vadd.f32 %v2037, %v2147
        %v2188 = vadd.f32 %v2038, %v2135
        %v2189 = vadd.f32 %v2039, %v2139
        %v2190 = vadd.f32 %v2040, %v2143
        %v2191 = vadd.f32 %v2041, %v2147
        %v2192 = vadd.f32 %v2042, %v2135
        %v2193 = vadd.f32 %v2043, %v2139
        %v2194 = vadd.f32 %v2044, %v2143
        %v2195 = vadd.f32 %v2045, %v2147
        %v2196 = vadd.f32 %v2046, %v2135
        %v2197 = vadd.f32 %v2047, %v2139
        %v2198 = vadd.f32 %v2048, %v2143
        %v2199 = vadd.f32 %v2049, %v2147
        %v2200 = vadd.f32 %v2050, %v2135
        %v2201 = vadd.f32 %v2051, %v2139
        %v2202 = vadd.f32 %v2052, %v2143
        %v2203 = vadd.f32 %v2053, %v2147
        %v2204 = vadd.f32 %v2054, %v2135
        %v2205 = vadd.f32 %v2055, %v2139
        %v2206 = vadd.f32 %v2056, %v2143
        %v2207 = vadd.f32 %v2057, %v2147
        %v2208 = vadd.f32 %v2058, %v2135
        %v2209 = vadd.f32 %v2059, %v2139
        %v2210 = vadd.f32 %v2060, %v2143
        %v2211 = vadd.f32 %v2061, %v2147
        %v2212 = vadd.f32 %v2062, %v2135
        %v2213 = vadd.f32 %v2063, %v2139
        %v2214 = vadd.f32 %v2064, %v2143
        %v2215 = vadd.f32 %v2065, %v2147
        %v2216 = vadd.f32 %v2066, %v2135
        %v2217 = vadd.f32 %v2067, %v2139
        %v2218 = vadd.f32 %v2068, %v2143
        %v2219 = vadd.f32 %v2069, %v2147
        %v2220 = vadd.f32 %v2070, %v2135
        %v2221 = vadd.f32 %v2071, %v2139
        %v2222 = vadd.f32 %v2072, %v2143
        %v2223 = vadd.f32 %v2073, %v2147
        %v2224 = vadd.f32 %v2074, %v2135
        %v2225 = vadd.f32 %v2075, %v2139
        %v2226 = vadd.f32 %v2076, %v2143
        %v2227 = vadd.f32 %v2077, %v2147
        %v2228 = vadd.f32 %v2078, %v2135
        %v2229 = vadd.f32 %v2079, %v2139
        %v2230 = vadd.f32 %v2080, %v2143
        %v2231 = vadd.f32 %v2081, %v2147
        %v2232 = vadd.f32 %v2082, %v2135
        %v2233 = vadd.f32 %v2083, %v2139
        %v2234 = vadd.f32 %v2084, %v2143
        %v2235 = vadd.f32 %v2085, %v2147
        %v2236 = vadd.f32 %v2086, %v2135
        %v2237 = vadd.f32 %v2087, %v2139
        %v2238 = vadd.f32 %v2088, %v2143
        %v2239 = vadd.f32 %v2089, %v2147
        %v2240 = vadd.f32 %v2090, %v2135
        %v2241 = vadd.f32 %v2091, %v2139
        %v2242 = vadd.f32 %v2092, %v2143
        %v2243 = vadd.f32 %v2093, %v2147
        %v2244 = vadd.f32 %v2094, %v2135
        %v2245 = vadd.f32 %v2095, %v2139
        %v2246 = vadd.f32 %v2096, %v2143
        %v2247 = vadd.f32 %v2097, %v2147
        %v2248 = vadd.f32 %v2098, %v2135
        %v2249 = vadd.f32 %v2099, %v2139
        %v2250 = vadd.f32 %v2100, %v2143
        %v2251 = vadd.f32 %v2101, %v2147
        %v2252 = vadd.f32 %v2102, %v2135
        %v2253 = vadd.f32 %v2103, %v2139
        %v2254 = vadd.f32 %v2104, %v2143
        %v2255 = vadd.f32 %v2105, %v2147
        %v2256 = vadd.f32 %v2106, %v2135
        %v2257 = vadd.f32 %v2107, %v2139
        %v2258 = vadd.f32 %v2108, %v2143
        %v2259 = vadd.f32 %v2109, %v2147
        %v2260 = vadd.f32 %v2110, %v2135
        %v2261 = vadd.f32 %v2111, %v2139
        %v2262 = vadd.f32 %v2112, %v2143
        %v2263 = vadd.f32 %v2113, %v2147
        %v2264 = vadd.f32 %v2114, %v2135
        %v2265 = vadd.f32 %v2115, %v2139
        %v2266 = vadd.f32 %v2116, %v2143
        %v2267 = vadd.f32 %v2117, %v2147
        %v2268 = vadd.f32 %v2118, %v2135
        %v2269 = vadd.f32 %v2119, %v2139
        %v2270 = vadd.f32 %v2120, %v2143
        %v2271 = vadd.f32 %v2121, %v2147
        %v2272 = vadd.f32 %v2122, %v2135
        %v2273 = vadd.f32 %v2123, %v2139
        %v2274 = vadd.f32 %v2124, %v2143
        %v2275 = vadd.f32 %v2125, %v2147
        %v2276 = vadd.f32 %v2126, %v2135
        %v2277 = vadd.f32 %v2127, %v2139
        %v2278 = vadd.f32 %v2128, %v2143
        %v2279 = vadd.f32 %v2129, %v2147
        %2280 = vst [vmem:[%s368] sm:$0xff] %v2152
        %2281 = vst [vmem:[%s368 + $0x8] sm:$0xff] %v2153
        %2282 = vst [vmem:[%s368 + $0x10] sm:$0xff] %v2154
        %2283 = vst [vmem:[%s368 + $0x18] sm:$0xff] %v2155
        %2284 = vst [vmem:[%s368 + $0x20] sm:$0xff] %v2156
        %2285 = vst [vmem:[%s368 + $0x28] sm:$0xff] %v2157
        %2286 = vst [vmem:[%s368 + $0x30] sm:$0xff] %v2158
        %2287 = vst [vmem:[%s368 + $0x38] sm:$0xff] %v2159
        %2288 = vst [vmem:[%s368 + $0x40] sm:$0xff] %v2160
        %2289 = vst [vmem:[%s368 + $0x48] sm:$0xff] %v2161
        %2290 = vst [vmem:[%s368 + $0x50] sm:$0xff] %v2162
        %2291 = vst [vmem:[%s368 + $0x58] sm:$0xff] %v2163
        %2292 = vst [vmem:[%s368 + $0x60] sm:$0xff] %v2164
        %2293 = vst [vmem:[%s368 + $0x68] sm:$0xff] %v2165
        %2294 = vst [vmem:[%s368 + $0x70] sm:$0xff] %v2166
        %2295 = vst [vmem:[%s368 + $0x78] sm:$0xff] %v2167
        %2296 = vst [vmem:[%s368 + $0x80] sm:$0xff] %v2168
        %2297 = vst [vmem:[%s368 + $0x88] sm:$0xff] %v2169
        %2298 = vst [vmem:[%s368 + $0x90] sm:$0xff] %v2170
        %2299 = vst [vmem:[%s368 + $0x98] sm:$0xff] %v2171
        %2300 = vst [vmem:[%s368 + $0xa0] sm:$0xff] %v2172
        %2301 = vst [vmem:[%s368 + $0xa8] sm:$0xff] %v2173
        %2302 = vst [vmem:[%s368 + $0xb0] sm:$0xff] %v2174
        %2303 = vst [vmem:[%s368 + $0xb8] sm:$0xff] %v2175
        %2304 = vst [vmem:[%s368 + $0xc0] sm:$0xff] %v2176
        %2305 = vst [vmem:[%s368 + $0xc8] sm:$0xff] %v2177
        %2306 = vst [vmem:[%s368 + $0xd0] sm:$0xff] %v2178
        %2307 = vst [vmem:[%s368 + $0xd8] sm:$0xff] %v2179
        %2308 = vst [vmem:[%s368 + $0xe0] sm:$0xff] %v2180
        %2309 = vst [vmem:[%s368 + $0xe8] sm:$0xff] %v2181
        %2310 = vst [vmem:[%s368 + $0xf0] sm:$0xff] %v2182
        %2311 = vst [vmem:[%s368 + $0xf8] sm:$0xff] %v2183
        %2312 = vst [vmem:[%s368 + $0x100] sm:$0xff] %v2184
        %2313 = vst [vmem:[%s368 + $0x108] sm:$0xff] %v2185
        %2314 = vst [vmem:[%s368 + $0x110] sm:$0xff] %v2186
        %2315 = vst [vmem:[%s368 + $0x118] sm:$0xff] %v2187
        %2316 = vst [vmem:[%s368 + $0x120] sm:$0xff] %v2188
        %2317 = vst [vmem:[%s368 + $0x128] sm:$0xff] %v2189
        %2318 = vst [vmem:[%s368 + $0x130] sm:$0xff] %v2190
        %2319 = vst [vmem:[%s368 + $0x138] sm:$0xff] %v2191
        %2320 = vst [vmem:[%s368 + $0x140] sm:$0xff] %v2192
        %2321 = vst [vmem:[%s368 + $0x148] sm:$0xff] %v2193
        %2322 = vst [vmem:[%s368 + $0x150] sm:$0xff] %v2194
        %2323 = vst [vmem:[%s368 + $0x158] sm:$0xff] %v2195
        %2324 = vst [vmem:[%s368 + $0x160] sm:$0xff] %v2196
        %2325 = vst [vmem:[%s368 + $0x168] sm:$0xff] %v2197
        %2326 = vst [vmem:[%s368 + $0x170] sm:$0xff] %v2198
        %2327 = vst [vmem:[%s368 + $0x178] sm:$0xff] %v2199
        %2328 = vst [vmem:[%s368 + $0x180] sm:$0xff] %v2200
        %2329 = vst [vmem:[%s368 + $0x188] sm:$0xff] %v2201
        %2330 = vst [vmem:[%s368 + $0x190] sm:$0xff] %v2202
        %2331 = vst [vmem:[%s368 + $0x198] sm:$0xff] %v2203
        %2332 = vst [vmem:[%s368 + $0x1a0] sm:$0xff] %v2204
        %2333 = vst [vmem:[%s368 + $0x1a8] sm:$0xff] %v2205
        %2334 = vst [vmem:[%s368 + $0x1b0] sm:$0xff] %v2206
        %2335 = vst [vmem:[%s368 + $0x1b8] sm:$0xff] %v2207
        %2336 = vst [vmem:[%s368 + $0x1c0] sm:$0xff] %v2208
        %2337 = vst [vmem:[%s368 + $0x1c8] sm:$0xff] %v2209
        %2338 = vst [vmem:[%s368 + $0x1d0] sm:$0xff] %v2210
        %2339 = vst [vmem:[%s368 + $0x1d8] sm:$0xff] %v2211
        %2340 = vst [vmem:[%s368 + $0x1e0] sm:$0xff] %v2212
        %2341 = vst [vmem:[%s368 + $0x1e8] sm:$0xff] %v2213
        %2342 = vst [vmem:[%s368 + $0x1f0] sm:$0xff] %v2214
        %2343 = vst [vmem:[%s368 + $0x1f8] sm:$0xff] %v2215
        %2344 = vst [vmem:[%s368 + $0x200] sm:$0xff] %v2216
        %2345 = vst [vmem:[%s368 + $0x208] sm:$0xff] %v2217
        %2346 = vst [vmem:[%s368 + $0x210] sm:$0xff] %v2218
        %2347 = vst [vmem:[%s368 + $0x218] sm:$0xff] %v2219
        %2348 = vst [vmem:[%s368 + $0x220] sm:$0xff] %v2220
        %2349 = vst [vmem:[%s368 + $0x228] sm:$0xff] %v2221
        %2350 = vst [vmem:[%s368 + $0x230] sm:$0xff] %v2222
        %2351 = vst [vmem:[%s368 + $0x238] sm:$0xff] %v2223
        %2352 = vst [vmem:[%s368 + $0x240] sm:$0xff] %v2224
        %2353 = vst [vmem:[%s368 + $0x248] sm:$0xff] %v2225
        %2354 = vst [vmem:[%s368 + $0x250] sm:$0xff] %v2226
        %2355 = vst [vmem:[%s368 + $0x258] sm:$0xff] %v2227
        %2356 = vst [vmem:[%s368 + $0x260] sm:$0xff] %v2228
        %2357 = vst [vmem:[%s368 + $0x268] sm:$0xff] %v2229
        %2358 = vst [vmem:[%s368 + $0x270] sm:$0xff] %v2230
        %2359 = vst [vmem:[%s368 + $0x278] sm:$0xff] %v2231
        %2360 = vst [vmem:[%s368 + $0x280] sm:$0xff] %v2232
        %2361 = vst [vmem:[%s368 + $0x288] sm:$0xff] %v2233
        %2362 = vst [vmem:[%s368 + $0x290] sm:$0xff] %v2234
        %2363 = vst [vmem:[%s368 + $0x298] sm:$0xff] %v2235
        %2364 = vst [vmem:[%s368 + $0x2a0] sm:$0xff] %v2236
        %2365 = vst [vmem:[%s368 + $0x2a8] sm:$0xff] %v2237
        %2366 = vst [vmem:[%s368 + $0x2b0] sm:$0xff] %v2238
        %2367 = vst [vmem:[%s368 + $0x2b8] sm:$0xff] %v2239
        %2368 = vst [vmem:[%s368 + $0x2c0] sm:$0xff] %v2240
        %2369 = vst [vmem:[%s368 + $0x2c8] sm:$0xff] %v2241
        %2370 = vst [vmem:[%s368 + $0x2d0] sm:$0xff] %v2242
        %2371 = vst [vmem:[%s368 + $0x2d8] sm:$0xff] %v2243
        %2372 = vst [vmem:[%s368 + $0x2e0] sm:$0xff] %v2244
        %2373 = vst [vmem:[%s368 + $0x2e8] sm:$0xff] %v2245
        %2374 = vst [vmem:[%s368 + $0x2f0] sm:$0xff] %v2246
        %2375 = vst [vmem:[%s368 + $0x2f8] sm:$0xff] %v2247
        %2376 = vst [vmem:[%s368 + $0x300] sm:$0xff] %v2248
        %2377 = vst [vmem:[%s368 + $0x308] sm:$0xff] %v2249
        %2378 = vst [vmem:[%s368 + $0x310] sm:$0xff] %v2250
        %2379 = vst [vmem:[%s368 + $0x318] sm:$0xff] %v2251
        %2380 = vst [vmem:[%s368 + $0x320] sm:$0xff] %v2252
        %2381 = vst [vmem:[%s368 + $0x328] sm:$0xff] %v2253
        %2382 = vst [vmem:[%s368 + $0x330] sm:$0xff] %v2254
        %2383 = vst [vmem:[%s368 + $0x338] sm:$0xff] %v2255
        %2384 = vst [vmem:[%s368 + $0x340] sm:$0xff] %v2256
        %2385 = vst [vmem:[%s368 + $0x348] sm:$0xff] %v2257
        %2386 = vst [vmem:[%s368 + $0x350] sm:$0xff] %v2258
        %2387 = vst [vmem:[%s368 + $0x358] sm:$0xff] %v2259
        %2388 = vst [vmem:[%s368 + $0x360] sm:$0xff] %v2260
        %2389 = vst [vmem:[%s368 + $0x368] sm:$0xff] %v2261
        %2390 = vst [vmem:[%s368 + $0x370] sm:$0xff] %v2262
        %2391 = vst [vmem:[%s368 + $0x378] sm:$0xff] %v2263
        %2392 = vst [vmem:[%s368 + $0x380] sm:$0xff] %v2264
        %2393 = vst [vmem:[%s368 + $0x388] sm:$0xff] %v2265
        %2394 = vst [vmem:[%s368 + $0x390] sm:$0xff] %v2266
        %2395 = vst [vmem:[%s368 + $0x398] sm:$0xff] %v2267
        %2396 = vst [vmem:[%s368 + $0x3a0] sm:$0xff] %v2268
        %2397 = vst [vmem:[%s368 + $0x3a8] sm:$0xff] %v2269
        %2398 = vst [vmem:[%s368 + $0x3b0] sm:$0xff] %v2270
        %2399 = vst [vmem:[%s368 + $0x3b8] sm:$0xff] %v2271
        %2400 = vst [vmem:[%s368 + $0x3c0] sm:$0xff] %v2272
        %2401 = vst [vmem:[%s368 + $0x3c8] sm:$0xff] %v2273
        %2402 = vst [vmem:[%s368 + $0x3d0] sm:$0xff] %v2274
        %2403 = vst [vmem:[%s368 + $0x3d8] sm:$0xff] %v2275
        %2404 = vst [vmem:[%s368 + $0x3e0] sm:$0xff] %v2276
        %2405 = vst [vmem:[%s368 + $0x3e8] sm:$0xff] %v2277
        %2406 = vst [vmem:[%s368 + $0x3f0] sm:$0xff] %v2278
        %2407 = vst [vmem:[%s368 + $0x3f8] sm:$0xff] %v2279
        %s2408 = sand.u32 %s248, 1
        %s2409 = scalar_lea.sflag [#allocation4], %s2408
        %s2410 = sand.u32 %s248, 1
        %s2411 = smul.addr %s2410, 1024
        %s2412 = scalar_lea.vmem [#allocation5], %s2411
        // Predicated region
        $region65: #{tpu_custom_call.1} parent=59 // pred_check
          %p2413 = pneg %p258
        $region66: #{tpu_custom_call.1} parent=59 // pred_check_branch
          %2415 = sbr.rel (%p2413) target = $region68
        $region67: #{tpu_custom_call.1} parent=59 // pred_region
          %s2416 = smul.u32 32, %s25
          %s2418 = ssub.s32 16384, 16384
          %2419 = vsyncadd %s2409, %s2418
          %s2420 = smul.addr %s2416, 4
          %s2421 = smul.addr %s2420, 128
          %s2422 = scalar_lea.hbm %s10, %s2421
          %s2423 = sshll.u32 %s2412, 4
          %s2424 = int_to_ptr.vmem [resolvable:$true] %s2423
          %2429 = dma.vmem_to_hbm [thread:$0]  %s2424, 16384, %s2422, %s2409, 512, 512, 32
        $region68: #{tpu_custom_call.1} parent=59 // pred_fallthru
          _
      $region60: #{tpu_custom_call.1} parent=5 // pred_fallthru
        _
      %p2430 = scmp.le.s32.totalorder 2, %s20
      // Predicated region
      $region69: #{tpu_custom_call.1} parent=5 // pred_check
        %p2431 = pneg %p2430
      $region70: #{tpu_custom_call.1} parent=5 // pred_check_branch
        %2433 = sbr.rel (%p2431) target = $region72
      $region71: #{tpu_custom_call.1} parent=5 // pred_region
        %s2434 = ssub.s32 %s20, 2
        // Predicated region
        $region73: #{tpu_custom_call.1} parent=71 // pred_check
          %p2435 = pneg %p264
        $region74: #{tpu_custom_call.1} parent=71 // pred_check_branch
          %2437 = sbr.rel (%p2435) target = $region76
        $region75: #{tpu_custom_call.1} parent=71 // pred_region
          %s2438 = sand.u32 %s249, 1
          %s2439 = scalar_lea.sflag [#allocation4], %s2438
          %s2440 = sand.u32 %s249, 1
          %s2441 = smul.addr %s2440, 1024
          %s2442 = scalar_lea.vmem [#allocation5], %s2441
          %2443 = dma.done %s2439, 16384
        $region76: #{tpu_custom_call.1} parent=71 // pred_fallthru
          _
      $region72: #{tpu_custom_call.1} parent=5 // pred_fallthru
        _
    $region6: #{tpu_custom_call.1} parent=1 // loop_footer
      %s24 = sadd.s32 1, %s20
    $region7: #{tpu_custom_call.1} parent=1 // loop_footer_branch
      %19 = sbr.rel target = $region3
    $region8: #{tpu_custom_call.1} parent=1 // loop_exit
      _
    %2444 = vsyncpa [#allocation3], 1
    %s2445 = scalar_lea.sflag [#allocation3], 1
    %2446 = vsyncpa %s2445, 1
    %2447 = vsyncpa [#allocation4], 1
    %s2448 = scalar_lea.sflag [#allocation4], 1
    %2449 = vsyncpa %s2448, 1

</llo_original>
